<compile_context>
chip_gen: v6e
topology: v6e:2x2x1
jax: 0.10.0
libtpu: 0.0.40
codegen_flags: <defaults>
</compile_context>

<pallas_src>
import functools

import jax
import jax.numpy as jnp
from jax.experimental import pallas as pl
from jax.experimental.pallas import tpu as pltpu


_TAPS = tuple((ky, kx) for ky in range(3) for kx in range(3))


def _round_up(v, m):
    return ((v + m - 1) // m) * m


def _sigmoid(z):
    return 1.0 / (1.0 + jnp.exp(-z))


def _cbam_kernel(
    colmask_ref, sel2_ref, x_ref,
    w1_ref, b1_ref, w2a_ref, b2a_ref, w2b_ref, b2b_ref,
    w3a_ref, b3a_ref, w3b_ref, b3b_ref,
    out_ref,
    xg_ref, patch1_ref, sg_ref, patch3a_ref, hg_ref, patch3b_ref,
    *, h, w, g,
):
    """Whole CBAM forward for one sample in flat (channels, h*w) layout.

    Guarded buffers (xg/sg/hg) have shape (rows, g + h*w + g) with g a
    multiple of 128 and >= w+1: lane q = y*w + x of the data region is pixel
    (y, x); a 3x3 tap (ky, kx) is the data region shifted by (ky-1)*w+(kx-1).
    Row overflow lands in the zero guards; column wrap is killed by the
    precomputed per-kx lane masks.  Every scratch byte that is read is written
    earlier in the SAME grid step (no persistence assumptions).
    """
    f32 = jnp.float32
    hw = h * w

    # f32 column-validity masks, indexed by kx (kx=1 needs none):
    #   kx=0 reads x-1 -> invalid at x==0 ; kx=2 reads x+1 -> invalid at x==w-1
    col_mask = (colmask_ref[0:1, :], None, colmask_ref[1:2, :])

    def fill_guarded(dst_ref, data=None):
        rows = dst_ref.shape[0]
        dst_ref[:, 0:g] = jnp.zeros((rows, g), f32)
        dst_ref[:, g + hw:g + hw + g] = jnp.zeros((rows, g), f32)
        if data is not None:
            dst_ref[:, g:g + hw] = data

    def tap_slice(src_ref, ky, kx):
        start = g + (ky - 1) * w + (kx - 1)        # >= g - w - 1 >= 0
        v = src_ref[:, start:start + hw]           # unaligned lane load (cheap)
        if kx != 1:
            v = v * col_mask[kx]                   # kill column wrap
        return v

    def gather_taps(src_ref, patch_ref):
        nsrc = src_ref.shape[0]
        for k, (ky, kx) in enumerate(_TAPS):       # tight pack: K = 9 * nsrc
            patch_ref[k * nsrc:(k + 1) * nsrc, :] = tap_slice(src_ref, ky, kx)

    # ---- conv1: 3x3 c->c as ONE MXU matmul with K = 9*c ----------------------
    fill_guarded(xg_ref, x_ref[...])
    gather_taps(xg_ref, patch1_ref)
    y1 = jnp.dot(w1_ref[...], patch1_ref[...],
                 preferred_element_type=f32) + b1_ref[...]              # (c, hw)

    # ---- channel attention: avg & max branches fused into one N=2 MLP --------
    avg_v = jnp.sum(y1, axis=1, keepdims=True) * (1.0 / float(hw))      # (c, 1)
    max_v = jnp.max(y1, axis=1, keepdims=True)                          # (c, 1)
    sel = sel2_ref[...]                                                 # (1,2)=[1,0]
    v2 = avg_v * sel + max_v * (1.0 - sel)                              # (c, 2)
    hid = jnp.maximum(
        jnp.dot(w2a_ref[...], v2, preferred_element_type=f32) + b2a_ref[...],
        0.0)
    z2 = jnp.dot(w2b_ref[...], hid, preferred_element_type=f32) + b2b_ref[...]
    ca = _sigmoid(jnp.sum(z2, axis=1, keepdims=True))                   # (c, 1)
    xs = y1 * ca                                                        # (c, hw)

    # ---- spatial attention ----------------------------------------------------
    fill_guarded(sg_ref)
    sg_ref[0:1, g:g + hw] = jnp.mean(xs, axis=0, keepdims=True)
    sg_ref[1:2, g:g + hw] = jnp.max(xs, axis=0, keepdims=True)

    # conv3[0]: 3x3, 2->16, K = 18
    gather_taps(sg_ref, patch3a_ref)
    h3 = jnp.maximum(
        jnp.dot(w3a_ref[...], patch3a_ref[...],
                preferred_element_type=f32) + b3a_ref[...], 0.0)        # (16, hw)

    # conv3[1]: 3x3, 16->1, K = 144
    fill_guarded(hg_ref, h3)
    gather_taps(hg_ref, patch3b_ref)
    sa = _sigmoid(
        jnp.dot(w3b_ref[...], patch3b_ref[...],
                preferred_element_type=f32) + b3b_ref[...])             # (1, hw)

    out_ref[...] = xs * sa                                              # lane-dense


def _w_to_mat(w_oihw):
    """(Cout, Cin, 3, 3) -> (Cout, 9*Cin), column = (ky*3+kx)*Cin + ci."""
    cout, cin, kh, kw = w_oihw.shape
    return jnp.transpose(w_oihw, (0, 2, 3, 1)).reshape(cout, kh * kw * cin)


@jax.jit
def cbam_forward(x, params):
    """CBAM forward. x: (N, C, H, W) float32, params: dict (PyTorch layouts)."""
    n, c, h, w = x.shape
    hw = h * w
    g = _round_up(w + 1, 128)          # guard lanes; keeps data-region stores aligned
    buf_len = hw + 2 * g
    f32 = jnp.float32

    x2 = x.reshape(n, c, hw)           # free metadata-only reshape, no HBM copy

    lane_x = jnp.arange(hw) % w
    colmask = jnp.stack([lane_x >= 1, lane_x <= w - 2]).astype(f32)     # (2, hw)
    sel2 = jnp.array([[1.0, 0.0]], f32)                                 # (1, 2)

    w1m = _w_to_mat(params["w1"])                     # (c, 9*c)
    w3am = _w_to_mat(params["w3a"])                   # (16, 18)
    w3bm = _w_to_mat(params["w3b"])                   # (1, 144)
    b1 = params["b1"].reshape(c, 1)
    w2a = params["w2a"].reshape(c, c)
    b2a = params["b2a"].reshape(c, 1)
    w2b = params["w2b"].reshape(c, c)
    b2b = params["b2b"].reshape(c, 1)
    b3a = params["b3a"].reshape(16, 1)
    b3b = params["b3b"].reshape(1, 1)

    kernel = functools.partial(_cbam_kernel, h=h, w=w, g=g)
    const = lambda i: (0, 0)
    per_n = lambda i: (i, 0, 0)

    out = pl.pallas_call(
        kernel,
        out_shape=jax.ShapeDtypeStruct((n, c, hw), f32),
        grid=(n,),
        in_specs=[
            pl.BlockSpec((2, hw), const),              # column-wrap masks
            pl.BlockSpec((1, 2), const),               # [1,0] selector (MLP fuse)
            pl.BlockSpec((None, c, hw), per_n),        # input sample (lane-dense)
            pl.BlockSpec((c, 9 * c), const),           # conv1 weight
            pl.BlockSpec((c, 1), const),               # conv1 bias
            pl.BlockSpec((c, c), const),               # conv2[0] weight
            pl.BlockSpec((c, 1), const),               # conv2[0] bias
            pl.BlockSpec((c, c), const),               # conv2[1] weight
            pl.BlockSpec((c, 1), const),               # conv2[1] bias
            pl.BlockSpec((16, 18), const),             # conv3[0] weight
            pl.BlockSpec((16, 1), const),              # conv3[0] bias
            pl.BlockSpec((1, 144), const),             # conv3[1] weight
            pl.BlockSpec((1, 1), const),               # conv3[1] bias
        ],
        out_specs=pl.BlockSpec((None, c, hw), per_n),
        scratch_shapes=[
            pltpu.VMEM((c, buf_len), f32),             # guarded input
            pltpu.VMEM((9 * c, hw), f32),              # conv1 patches (K=9c)
            pltpu.VMEM((2, buf_len), f32),             # guarded [mean_c, max_c]
            pltpu.VMEM((9 * 2, hw), f32),              # conv3[0] patches (K=18)
            pltpu.VMEM((16, buf_len), f32),            # guarded relu(conv3[0])
            pltpu.VMEM((9 * 16, hw), f32),             # conv3[1] patches (K=144)
        ],
        compiler_params=pltpu.CompilerParams(
            dimension_semantics=("parallel",),
            vmem_limit_bytes=32 * 1024 * 1024,
        ),
    )(colmask, sel2, x2, w1m, b1, w2a, b2a, w2b, b2b, w3am, b3a, w3bm, b3b)

    return out.reshape(n, c, h, w)                     # free reshape


def init_params(key, c):
    """Deterministic synthetic params in PyTorch layouts."""
    keys = jax.random.split(key, 10)

    def conv_w(k, cout, cin, kh, kw):
        bound = (6.0 / (cin * kh * kw)) ** 0.5
        return jax.random.uniform(k, (cout, cin, kh, kw), jnp.float32,
                                  -bound, bound)

    def bias(k, cout):
        return 0.05 * jax.random.normal(k, (cout,), jnp.float32)

    return {
        "w1": conv_w(keys[0], c, c, 3, 3), "b1": bias(keys[1], c),
        "w2a": conv_w(keys[2], c, c, 1, 1), "b2a": bias(keys[3], c),
        "w2b": conv_w(keys[4], c, c, 1, 1), "b2b": bias(keys[5], c),
        "w3a": conv_w(keys[6], 16, 2, 3, 3), "b3a": bias(keys[7], 16),
        "w3b": conv_w(keys[8], 1, 16, 3, 3), "b3b": bias(keys[9], 1),
    }


def _reference_forward(x, p):
    """Pure-JAX/XLA reference for validation."""
    prec = jax.lax.Precision.HIGHEST
    dn = ("NCHW", "OIHW", "NCHW")
    c = x.shape[1]

    def conv(v, wgt, b, pad):
        y = jax.lax.conv_general_dilated(
            v, wgt, (1, 1), [(pad, pad), (pad, pad)],
            dimension_numbers=dn, precision=prec)
        return y + b.reshape(1, -1, 1, 1)

    x1 = conv(x, p["w1"], p["b1"], 1)

    avg = jnp.mean(x1, axis=(2, 3))
    mx = jnp.max(x1, axis=(2, 3))
    w2a = p["w2a"].reshape(c, c)
    w2b = p["w2b"].reshape(c, c)

    def mlp(v):
        hid = jnp.maximum(jnp.dot(v, w2a.T, precision=prec) + p["b2a"], 0.0)
        return jnp.dot(hid, w2b.T, precision=prec) + p["b2b"]

    ca = jax.nn.sigmoid(mlp(avg) + mlp(mx))
    xs = x1 * ca[:, :, None, None]

    s_in = jnp.concatenate(
        [jnp.mean(xs, axis=1, keepdims=True),
         jnp.max(xs, axis=1, keepdims=True)], axis=1)
    h3 = jnp.maximum(conv(s_in, p["w3a"], p["b3a"], 1), 0.0)
    sa = jax.nn.sigmoid(conv(h3, p["w3b"], p["b3b"], 1))
    return xs * sa


if __name__ == "__main__":
    key = jax.random.PRNGKey(0)
    k_x, k_p = jax.random.split(key)

    N, C, H, W = 2, 4, 16, 16
    x = jax.random.normal(k_x, (N, C, H, W), jnp.float32)
    params = init_params(k_p, C)

    out = jax.block_until_ready(cbam_forward(x, params))
    assert out.shape == (N, C, H, W)

    ref = jax.block_until_ready(_reference_forward(x, params))
    err = float(jnp.max(jnp.abs(out - ref)))
    assert jnp.allclose(out, ref, atol=2e-3, rtol=2e-3), (
        "mismatch vs reference: max abs err = %g" % err)

    print("KERNEL_OK")
</pallas_src>

<mosaic_0001>
module attributes {stable_mosaic.version = 11 : i64} {
  func.func @_cbam_kernel(%arg0: i32, %arg1: memref<2x256xf32, #tpu.memory_space<vmem>>, %arg2: memref<1x2xf32, #tpu.memory_space<vmem>>, %arg3: memref<1x4x256xf32, #tpu.memory_space<vmem>>, %arg4: memref<4x36xf32, #tpu.memory_space<vmem>>, %arg5: memref<4x1xf32, #tpu.memory_space<vmem>>, %arg6: memref<4x4xf32, #tpu.memory_space<vmem>>, %arg7: memref<4x1xf32, #tpu.memory_space<vmem>>, %arg8: memref<4x4xf32, #tpu.memory_space<vmem>>, %arg9: memref<4x1xf32, #tpu.memory_space<vmem>>, %arg10: memref<16x18xf32, #tpu.memory_space<vmem>>, %arg11: memref<16x1xf32, #tpu.memory_space<vmem>>, %arg12: memref<1x144xf32, #tpu.memory_space<vmem>>, %arg13: memref<1x1xf32, #tpu.memory_space<vmem>>, %arg14: memref<1x4x256xf32, #tpu.memory_space<vmem>>, %arg15: memref<4x512xf32, #tpu.memory_space<vmem>>, %arg16: memref<36x256xf32, #tpu.memory_space<vmem>>, %arg17: memref<2x512xf32, #tpu.memory_space<vmem>>, %arg18: memref<18x256xf32, #tpu.memory_space<vmem>>, %arg19: memref<16x512xf32, #tpu.memory_space<vmem>>, %arg20: memref<144x256xf32, #tpu.memory_space<vmem>>) attributes {dimension_semantics = [#tpu.dimension_semantics<parallel>], iteration_bounds = array<i64: 2>, scalar_prefetch = 0 : i64, scratch_operands = 6 : i64, tpu.core_type = #tpu.core_type<tc>, window_params = [{pipeline_mode = #tpu.pipeline_mode<synchronous>, transform_indices = @transform_0, window_bounds = array<i64: 2, 256>}, {pipeline_mode = #tpu.pipeline_mode<synchronous>, transform_indices = @transform_1, window_bounds = array<i64: 1, 2>}, {transform_indices = @transform_2, window_bounds = array<i64: 1, 4, 256>}, {pipeline_mode = #tpu.pipeline_mode<synchronous>, transform_indices = @transform_3, window_bounds = array<i64: 4, 36>}, {pipeline_mode = #tpu.pipeline_mode<synchronous>, transform_indices = @transform_4, window_bounds = array<i64: 4, 1>}, {pipeline_mode = #tpu.pipeline_mode<synchronous>, transform_indices = @transform_5, window_bounds = array<i64: 4, 4>}, {pipeline_mode = #tpu.pipeline_mode<synchronous>, transform_indices = @transform_6, window_bounds = array<i64: 4, 1>}, {pipeline_mode = #tpu.pipeline_mode<synchronous>, transform_indices = @transform_7, window_bounds = array<i64: 4, 4>}, {pipeline_mode = #tpu.pipeline_mode<synchronous>, transform_indices = @transform_8, window_bounds = array<i64: 4, 1>}, {pipeline_mode = #tpu.pipeline_mode<synchronous>, transform_indices = @transform_9, window_bounds = array<i64: 16, 18>}, {pipeline_mode = #tpu.pipeline_mode<synchronous>, transform_indices = @transform_10, window_bounds = array<i64: 16, 1>}, {pipeline_mode = #tpu.pipeline_mode<synchronous>, transform_indices = @transform_11, window_bounds = array<i64: 1, 144>}, {pipeline_mode = #tpu.pipeline_mode<synchronous>, transform_indices = @transform_12, window_bounds = array<i64: 1, 1>}, {transform_indices = @transform_13, window_bounds = array<i64: 1, 4, 256>}]} {
    %c0 = arith.constant 0 : index
    %c0_0 = arith.constant 0 : index
    %0 = vector.load %arg1[%c0, %c0_0] : memref<2x256xf32, #tpu.memory_space<vmem>>, vector<1x256xf32>
    %c1 = arith.constant 1 : index
    %c0_1 = arith.constant 0 : index
    %1 = vector.load %arg1[%c1, %c0_1] : memref<2x256xf32, #tpu.memory_space<vmem>>, vector<1x256xf32>
    %c0_2 = arith.constant 0 : index
    %c0_3 = arith.constant 0 : index
    %c0_4 = arith.constant 0 : index
    %2 = vector.load %arg3[%c0_2, %c0_3, %c0_4] : memref<1x4x256xf32, #tpu.memory_space<vmem>>, vector<1x4x256xf32>
    %3 = vector.shape_cast %2 : vector<1x4x256xf32> to vector<4x256xf32>
    %cst = arith.constant 0.000000e+00 : f32
    %4 = vector.broadcast %cst : f32 to vector<4x128xf32>
    %c0_5 = arith.constant 0 : index
    %c0_6 = arith.constant 0 : index
    %5 = vector.load %arg15[%c0_5, %c0_6] : memref<4x512xf32, #tpu.memory_space<vmem>>, vector<4x128xf32>
    tpu.vector_store %arg15[%c0_5, %c0_6], %4 {strides = array<i32>} : memref<4x512xf32, #tpu.memory_space<vmem>>, vector<4x128xf32>,
    %cst_7 = arith.constant 0.000000e+00 : f32
    %6 = vector.broadcast %cst_7 : f32 to vector<4x128xf32>
    %c0_8 = arith.constant 0 : index
    %c384 = arith.constant 384 : index
    %7 = vector.load %arg15[%c0_8, %c384] : memref<4x512xf32, #tpu.memory_space<vmem>>, vector<4x128xf32>
    tpu.vector_store %arg15[%c0_8, %c384], %6 {strides = array<i32>} : memref<4x512xf32, #tpu.memory_space<vmem>>, vector<4x128xf32>,
    %c0_9 = arith.constant 0 : index
    %c128 = arith.constant 128 : index
    %8 = vector.load %arg15[%c0_9, %c128] : memref<4x512xf32, #tpu.memory_space<vmem>>, vector<4x256xf32>
    tpu.vector_store %arg15[%c0_9, %c128], %3 {strides = array<i32>} : memref<4x512xf32, #tpu.memory_space<vmem>>, vector<4x256xf32>,
    %c0_10 = arith.constant 0 : index
    %c111 = arith.constant 111 : index
    %9 = vector.load %arg15[%c0_10, %c111] : memref<4x512xf32, #tpu.memory_space<vmem>>, vector<4x256xf32>
    %10 = vector.broadcast %0 : vector<1x256xf32> to vector<4x256xf32>
    %11 = arith.mulf %9, %10 : vector<4x256xf32>
    %c0_11 = arith.constant 0 : index
    %c0_12 = arith.constant 0 : index
    %12 = vector.load %arg16[%c0_11, %c0_12] : memref<36x256xf32, #tpu.memory_space<vmem>>, vector<4x256xf32>
    tpu.vector_store %arg16[%c0_11, %c0_12], %11 {strides = array<i32>} : memref<36x256xf32, #tpu.memory_space<vmem>>, vector<4x256xf32>,
    %c0_13 = arith.constant 0 : index
    %c112 = arith.constant 112 : index
    %13 = vector.load %arg15[%c0_13, %c112] : memref<4x512xf32, #tpu.memory_space<vmem>>, vector<4x256xf32>
    %c4 = arith.constant 4 : index
    %c0_14 = arith.constant 0 : index
    %14 = vector.load %arg16[%c4, %c0_14] : memref<36x256xf32, #tpu.memory_space<vmem>>, vector<4x256xf32>
    tpu.vector_store %arg16[%c4, %c0_14], %13 {strides = array<i32>} : memref<36x256xf32, #tpu.memory_space<vmem>>, vector<4x256xf32>,
    %c0_15 = arith.constant 0 : index
    %c113 = arith.constant 113 : index
    %15 = vector.load %arg15[%c0_15, %c113] : memref<4x512xf32, #tpu.memory_space<vmem>>, vector<4x256xf32>
    %16 = vector.broadcast %1 : vector<1x256xf32> to vector<4x256xf32>
    %17 = arith.mulf %15, %16 : vector<4x256xf32>
    %c8 = arith.constant 8 : index
    %c0_16 = arith.constant 0 : index
    %18 = vector.load %arg16[%c8, %c0_16] : memref<36x256xf32, #tpu.memory_space<vmem>>, vector<4x256xf32>
    tpu.vector_store %arg16[%c8, %c0_16], %17 {strides = array<i32>} : memref<36x256xf32, #tpu.memory_space<vmem>>, vector<4x256xf32>,
    %c0_17 = arith.constant 0 : index
    %c127 = arith.constant 127 : index
    %19 = vector.load %arg15[%c0_17, %c127] : memref<4x512xf32, #tpu.memory_space<vmem>>, vector<4x256xf32>
    %20 = vector.broadcast %0 : vector<1x256xf32> to vector<4x256xf32>
    %21 = arith.mulf %19, %20 : vector<4x256xf32>
    %c12 = arith.constant 12 : index
    %c0_18 = arith.constant 0 : index
    %22 = vector.load %arg16[%c12, %c0_18] : memref<36x256xf32, #tpu.memory_space<vmem>>, vector<4x256xf32>
    tpu.vector_store %arg16[%c12, %c0_18], %21 {strides = array<i32>} : memref<36x256xf32, #tpu.memory_space<vmem>>, vector<4x256xf32>,
    %c0_19 = arith.constant 0 : index
    %c128_20 = arith.constant 128 : index
    %23 = vector.load %arg15[%c0_19, %c128_20] : memref<4x512xf32, #tpu.memory_space<vmem>>, vector<4x256xf32>
    %c16 = arith.constant 16 : index
    %c0_21 = arith.constant 0 : index
    %24 = vector.load %arg16[%c16, %c0_21] : memref<36x256xf32, #tpu.memory_space<vmem>>, vector<4x256xf32>
    tpu.vector_store %arg16[%c16, %c0_21], %23 {strides = array<i32>} : memref<36x256xf32, #tpu.memory_space<vmem>>, vector<4x256xf32>,
    %c0_22 = arith.constant 0 : index
    %c129 = arith.constant 129 : index
    %25 = vector.load %arg15[%c0_22, %c129] : memref<4x512xf32, #tpu.memory_space<vmem>>, vector<4x256xf32>
    %26 = vector.broadcast %1 : vector<1x256xf32> to vector<4x256xf32>
    %27 = arith.mulf %25, %26 : vector<4x256xf32>
    %c20 = arith.constant 20 : index
    %c0_23 = arith.constant 0 : index
    %28 = vector.load %arg16[%c20, %c0_23] : memref<36x256xf32, #tpu.memory_space<vmem>>, vector<4x256xf32>
    tpu.vector_store %arg16[%c20, %c0_23], %27 {strides = array<i32>} : memref<36x256xf32, #tpu.memory_space<vmem>>, vector<4x256xf32>,
    %c0_24 = arith.constant 0 : index
    %c143 = arith.constant 143 : index
    %29 = vector.load %arg15[%c0_24, %c143] : memref<4x512xf32, #tpu.memory_space<vmem>>, vector<4x256xf32>
    %30 = vector.broadcast %0 : vector<1x256xf32> to vector<4x256xf32>
    %31 = arith.mulf %29, %30 : vector<4x256xf32>
    %c24 = arith.constant 24 : index
    %c0_25 = arith.constant 0 : index
    %32 = vector.load %arg16[%c24, %c0_25] : memref<36x256xf32, #tpu.memory_space<vmem>>, vector<4x256xf32>
    tpu.vector_store %arg16[%c24, %c0_25], %31 {strides = array<i32>} : memref<36x256xf32, #tpu.memory_space<vmem>>, vector<4x256xf32>,
    %c0_26 = arith.constant 0 : index
    %c144 = arith.constant 144 : index
    %33 = vector.load %arg15[%c0_26, %c144] : memref<4x512xf32, #tpu.memory_space<vmem>>, vector<4x256xf32>
    %c28 = arith.constant 28 : index
    %c0_27 = arith.constant 0 : index
    %34 = vector.load %arg16[%c28, %c0_27] : memref<36x256xf32, #tpu.memory_space<vmem>>, vector<4x256xf32>
    tpu.vector_store %arg16[%c28, %c0_27], %33 {strides = array<i32>} : memref<36x256xf32, #tpu.memory_space<vmem>>, vector<4x256xf32>,
    %c0_28 = arith.constant 0 : index
    %c145 = arith.constant 145 : index
    %35 = vector.load %arg15[%c0_28, %c145] : memref<4x512xf32, #tpu.memory_space<vmem>>, vector<4x256xf32>
    %36 = vector.broadcast %1 : vector<1x256xf32> to vector<4x256xf32>
    %37 = arith.mulf %35, %36 : vector<4x256xf32>
    %c32 = arith.constant 32 : index
    %c0_29 = arith.constant 0 : index
    %38 = vector.load %arg16[%c32, %c0_29] : memref<36x256xf32, #tpu.memory_space<vmem>>, vector<4x256xf32>
    tpu.vector_store %arg16[%c32, %c0_29], %37 {strides = array<i32>} : memref<36x256xf32, #tpu.memory_space<vmem>>, vector<4x256xf32>,
    %c0_30 = arith.constant 0 : index
    %c0_31 = arith.constant 0 : index
    %39 = vector.load %arg4[%c0_30, %c0_31] : memref<4x36xf32, #tpu.memory_space<vmem>>, vector<4x36xf32>
    %c0_32 = arith.constant 0 : index
    %c0_33 = arith.constant 0 : index
    %40 = vector.load %arg16[%c0_32, %c0_33] : memref<36x256xf32, #tpu.memory_space<vmem>>, vector<36x256xf32>
    %cst_34 = arith.constant dense<0.000000e+00> : vector<4x256xf32>
    %41 = tpu.matmul %39, %40, %cst_34 {dimension_numbers = #tpu.dot_dimension_numbers<[1], [0], [0], [1], [0, 0, 1, 1], [], []>} : vector<4x36xf32>, vector<36x256xf32>, vector<4x256xf32> -> vector<4x256xf32>
    %c0_35 = arith.constant 0 : index
    %c0_36 = arith.constant 0 : index
    %42 = vector.load %arg5[%c0_35, %c0_36] : memref<4x1xf32, #tpu.memory_space<vmem>>, vector<4x1xf32>
    %43 = vector.broadcast %42 : vector<4x1xf32> to vector<4x256xf32>
    %44 = arith.addf %41, %43 : vector<4x256xf32>
    %cst_37 = arith.constant dense<0.000000e+00> : vector<4xf32>
    %45 = vector.multi_reduction <add>, %44, %cst_37 [1] : vector<4x256xf32> to vector<4xf32>
    %46 = vector.shape_cast %45 : vector<4xf32> to vector<4x1xf32>
    %cst_38 = arith.constant 3.906250e-03 : f32
    %47 = vector.broadcast %cst_38 : f32 to vector<4x1xf32>
    %48 = arith.mulf %46, %47 : vector<4x1xf32>
    %cst_39 = arith.constant dense<0xFF800000> : vector<4xf32>
    %49 = vector.multi_reduction <maximumf>, %44, %cst_39 [1] : vector<4x256xf32> to vector<4xf32>
    %50 = vector.shape_cast %49 : vector<4xf32> to vector<4x1xf32>
    %c0_40 = arith.constant 0 : index
    %c0_41 = arith.constant 0 : index
    %51 = vector.load %arg2[%c0_40, %c0_41] : memref<1x2xf32, #tpu.memory_space<vmem>>, vector<1x2xf32>
    %52 = vector.broadcast %48 : vector<4x1xf32> to vector<4x2xf32>
    %53 = vector.broadcast %51 : vector<1x2xf32> to vector<4x2xf32>
    %54 = arith.mulf %52, %53 : vector<4x2xf32>
    %cst_42 = arith.constant 1.000000e+00 : f32
    %55 = vector.broadcast %cst_42 : f32 to vector<1x2xf32>
    %56 = arith.subf %55, %51 : vector<1x2xf32>
    %57 = vector.broadcast %50 : vector<4x1xf32> to vector<4x2xf32>
    %58 = vector.broadcast %56 : vector<1x2xf32> to vector<4x2xf32>
    %59 = arith.mulf %57, %58 : vector<4x2xf32>
    %60 = arith.addf %54, %59 : vector<4x2xf32>
    %c0_43 = arith.constant 0 : index
    %c0_44 = arith.constant 0 : index
    %61 = vector.load %arg6[%c0_43, %c0_44] : memref<4x4xf32, #tpu.memory_space<vmem>>, vector<4x4xf32>
    %cst_45 = arith.constant dense<0.000000e+00> : vector<4x2xf32>
    %62 = tpu.matmul %61, %60, %cst_45 {dimension_numbers = #tpu.dot_dimension_numbers<[1], [0], [0], [1], [0, 0, 1, 1], [], []>} : vector<4x4xf32>, vector<4x2xf32>, vector<4x2xf32> -> vector<4x2xf32>
    %c0_46 = arith.constant 0 : index
    %c0_47 = arith.constant 0 : index
    %63 = vector.load %arg7[%c0_46, %c0_47] : memref<4x1xf32, #tpu.memory_space<vmem>>, vector<4x1xf32>
    %64 = vector.broadcast %63 : vector<4x1xf32> to vector<4x2xf32>
    %65 = arith.addf %62, %64 : vector<4x2xf32>
    %cst_48 = arith.constant 0.000000e+00 : f32
    %66 = vector.broadcast %cst_48 : f32 to vector<4x2xf32>
    %67 = arith.maximumf %65, %66 : vector<4x2xf32>
    %c0_49 = arith.constant 0 : index
    %c0_50 = arith.constant 0 : index
    %68 = vector.load %arg8[%c0_49, %c0_50] : memref<4x4xf32, #tpu.memory_space<vmem>>, vector<4x4xf32>
    %cst_51 = arith.constant dense<0.000000e+00> : vector<4x2xf32>
    %69 = tpu.matmul %68, %67, %cst_51 {dimension_numbers = #tpu.dot_dimension_numbers<[1], [0], [0], [1], [0, 0, 1, 1], [], []>} : vector<4x4xf32>, vector<4x2xf32>, vector<4x2xf32> -> vector<4x2xf32>
    %c0_52 = arith.constant 0 : index
    %c0_53 = arith.constant 0 : index
    %70 = vector.load %arg9[%c0_52, %c0_53] : memref<4x1xf32, #tpu.memory_space<vmem>>, vector<4x1xf32>
    %71 = vector.broadcast %70 : vector<4x1xf32> to vector<4x2xf32>
    %72 = arith.addf %69, %71 : vector<4x2xf32>
    %cst_54 = arith.constant dense<0.000000e+00> : vector<4xf32>
    %73 = vector.multi_reduction <add>, %72, %cst_54 [1] : vector<4x2xf32> to vector<4xf32>
    %74 = vector.shape_cast %73 : vector<4xf32> to vector<4x1xf32>
    %cst_55 = arith.constant 0.000000e+00 : f32
    %75 = vector.broadcast %cst_55 : f32 to vector<4x1xf32>
    %76 = arith.subf %75, %74 : vector<4x1xf32>
    %77 = math.exp %76 : vector<4x1xf32>
    %cst_56 = arith.constant 1.000000e+00 : f32
    %78 = vector.broadcast %cst_56 : f32 to vector<4x1xf32>
    %79 = arith.addf %78, %77 : vector<4x1xf32>
    %cst_57 = arith.constant 1.000000e+00 : f32
    %80 = vector.broadcast %cst_57 : f32 to vector<4x1xf32>
    %81 = arith.divf %80, %79 : vector<4x1xf32>
    %82 = vector.broadcast %81 : vector<4x1xf32> to vector<4x256xf32>
    %83 = arith.mulf %44, %82 : vector<4x256xf32>
    %cst_58 = arith.constant 0.000000e+00 : f32
    %84 = vector.broadcast %cst_58 : f32 to vector<2x128xf32>
    %c0_59 = arith.constant 0 : index
    %c0_60 = arith.constant 0 : index
    %85 = vector.load %arg17[%c0_59, %c0_60] : memref<2x512xf32, #tpu.memory_space<vmem>>, vector<2x128xf32>
    tpu.vector_store %arg17[%c0_59, %c0_60], %84 {strides = array<i32>} : memref<2x512xf32, #tpu.memory_space<vmem>>, vector<2x128xf32>,
    %cst_61 = arith.constant 0.000000e+00 : f32
    %86 = vector.broadcast %cst_61 : f32 to vector<2x128xf32>
    %c0_62 = arith.constant 0 : index
    %c384_63 = arith.constant 384 : index
    %87 = vector.load %arg17[%c0_62, %c384_63] : memref<2x512xf32, #tpu.memory_space<vmem>>, vector<2x128xf32>
    tpu.vector_store %arg17[%c0_62, %c384_63], %86 {strides = array<i32>} : memref<2x512xf32, #tpu.memory_space<vmem>>, vector<2x128xf32>,
    %cst_64 = arith.constant dense<0.000000e+00> : vector<256xf32>
    %88 = vector.multi_reduction <add>, %83, %cst_64 [0] : vector<4x256xf32> to vector<256xf32>
    %89 = vector.shape_cast %88 : vector<256xf32> to vector<1x256xf32>
    %cst_65 = arith.constant 4.000000e+00 : f32
    %90 = vector.broadcast %cst_65 : f32 to vector<1x256xf32>
    %91 = arith.divf %89, %90 : vector<1x256xf32>
    %c0_66 = arith.constant 0 : index
    %c128_67 = arith.constant 128 : index
    %92 = vector.load %arg17[%c0_66, %c128_67] : memref<2x512xf32, #tpu.memory_space<vmem>>, vector<1x256xf32>
    tpu.vector_store %arg17[%c0_66, %c128_67], %91 {strides = array<i32>} : memref<2x512xf32, #tpu.memory_space<vmem>>, vector<1x256xf32>,
    %cst_68 = arith.constant dense<0xFF800000> : vector<256xf32>
    %93 = vector.multi_reduction <maximumf>, %83, %cst_68 [0] : vector<4x256xf32> to vector<256xf32>
    %94 = vector.shape_cast %93 : vector<256xf32> to vector<1x256xf32>
    %c1_69 = arith.constant 1 : index
    %c128_70 = arith.constant 128 : index
    %95 = vector.load %arg17[%c1_69, %c128_70] : memref<2x512xf32, #tpu.memory_space<vmem>>, vector<1x256xf32>
    tpu.vector_store %arg17[%c1_69, %c128_70], %94 {strides = array<i32>} : memref<2x512xf32, #tpu.memory_space<vmem>>, vector<1x256xf32>,
    %c0_71 = arith.constant 0 : index
    %c111_72 = arith.constant 111 : index
    %96 = vector.load %arg17[%c0_71, %c111_72] : memref<2x512xf32, #tpu.memory_space<vmem>>, vector<2x256xf32>
    %97 = vector.broadcast %0 : vector<1x256xf32> to vector<2x256xf32>
    %98 = arith.mulf %96, %97 : vector<2x256xf32>
    %c0_73 = arith.constant 0 : index
    %c0_74 = arith.constant 0 : index
    %99 = vector.load %arg18[%c0_73, %c0_74] : memref<18x256xf32, #tpu.memory_space<vmem>>, vector<2x256xf32>
    tpu.vector_store %arg18[%c0_73, %c0_74], %98 {strides = array<i32>} : memref<18x256xf32, #tpu.memory_space<vmem>>, vector<2x256xf32>,
    %c0_75 = arith.constant 0 : index
    %c112_76 = arith.constant 112 : index
    %100 = vector.load %arg17[%c0_75, %c112_76] : memref<2x512xf32, #tpu.memory_space<vmem>>, vector<2x256xf32>
    %c2 = arith.constant 2 : index
    %c0_77 = arith.constant 0 : index
    %101 = vector.load %arg18[%c2, %c0_77] : memref<18x256xf32, #tpu.memory_space<vmem>>, vector<2x256xf32>
    tpu.vector_store %arg18[%c2, %c0_77], %100 {strides = array<i32>} : memref<18x256xf32, #tpu.memory_space<vmem>>, vector<2x256xf32>,
    %c0_78 = arith.constant 0 : index
    %c113_79 = arith.constant 113 : index
    %102 = vector.load %arg17[%c0_78, %c113_79] : memref<2x512xf32, #tpu.memory_space<vmem>>, vector<2x256xf32>
    %103 = vector.broadcast %1 : vector<1x256xf32> to vector<2x256xf32>
    %104 = arith.mulf %102, %103 : vector<2x256xf32>
    %c4_80 = arith.constant 4 : index
    %c0_81 = arith.constant 0 : index
    %105 = vector.load %arg18[%c4_80, %c0_81] : memref<18x256xf32, #tpu.memory_space<vmem>>, vector<2x256xf32>
    tpu.vector_store %arg18[%c4_80, %c0_81], %104 {strides = array<i32>} : memref<18x256xf32, #tpu.memory_space<vmem>>, vector<2x256xf32>,
    %c0_82 = arith.constant 0 : index
    %c127_83 = arith.constant 127 : index
    %106 = vector.load %arg17[%c0_82, %c127_83] : memref<2x512xf32, #tpu.memory_space<vmem>>, vector<2x256xf32>
    %107 = vector.broadcast %0 : vector<1x256xf32> to vector<2x256xf32>
    %108 = arith.mulf %106, %107 : vector<2x256xf32>
    %c6 = arith.constant 6 : index
    %c0_84 = arith.constant 0 : index
    %109 = vector.load %arg18[%c6, %c0_84] : memref<18x256xf32, #tpu.memory_space<vmem>>, vector<2x256xf32>
    tpu.vector_store %arg18[%c6, %c0_84], %108 {strides = array<i32>} : memref<18x256xf32, #tpu.memory_space<vmem>>, vector<2x256xf32>,
    %c0_85 = arith.constant 0 : index
    %c128_86 = arith.constant 128 : index
    %110 = vector.load %arg17[%c0_85, %c128_86] : memref<2x512xf32, #tpu.memory_space<vmem>>, vector<2x256xf32>
    %c8_87 = arith.constant 8 : index
    %c0_88 = arith.constant 0 : index
    %111 = vector.load %arg18[%c8_87, %c0_88] : memref<18x256xf32, #tpu.memory_space<vmem>>, vector<2x256xf32>
    tpu.vector_store %arg18[%c8_87, %c0_88], %110 {strides = array<i32>} : memref<18x256xf32, #tpu.memory_space<vmem>>, vector<2x256xf32>,
    %c0_89 = arith.constant 0 : index
    %c129_90 = arith.constant 129 : index
    %112 = vector.load %arg17[%c0_89, %c129_90] : memref<2x512xf32, #tpu.memory_space<vmem>>, vector<2x256xf32>
    %113 = vector.broadcast %1 : vector<1x256xf32> to vector<2x256xf32>
    %114 = arith.mulf %112, %113 : vector<2x256xf32>
    %c10 = arith.constant 10 : index
    %c0_91 = arith.constant 0 : index
    %115 = vector.load %arg18[%c10, %c0_91] : memref<18x256xf32, #tpu.memory_space<vmem>>, vector<2x256xf32>
    tpu.vector_store %arg18[%c10, %c0_91], %114 {strides = array<i32>} : memref<18x256xf32, #tpu.memory_space<vmem>>, vector<2x256xf32>,
    %c0_92 = arith.constant 0 : index
    %c143_93 = arith.constant 143 : index
    %116 = vector.load %arg17[%c0_92, %c143_93] : memref<2x512xf32, #tpu.memory_space<vmem>>, vector<2x256xf32>
    %117 = vector.broadcast %0 : vector<1x256xf32> to vector<2x256xf32>
    %118 = arith.mulf %116, %117 : vector<2x256xf32>
    %c12_94 = arith.constant 12 : index
    %c0_95 = arith.constant 0 : index
    %119 = vector.load %arg18[%c12_94, %c0_95] : memref<18x256xf32, #tpu.memory_space<vmem>>, vector<2x256xf32>
    tpu.vector_store %arg18[%c12_94, %c0_95], %118 {strides = array<i32>} : memref<18x256xf32, #tpu.memory_space<vmem>>, vector<2x256xf32>,
    %c0_96 = arith.constant 0 : index
    %c144_97 = arith.constant 144 : index
    %120 = vector.load %arg17[%c0_96, %c144_97] : memref<2x512xf32, #tpu.memory_space<vmem>>, vector<2x256xf32>
    %c14 = arith.constant 14 : index
    %c0_98 = arith.constant 0 : index
    %121 = vector.load %arg18[%c14, %c0_98] : memref<18x256xf32, #tpu.memory_space<vmem>>, vector<2x256xf32>
    tpu.vector_store %arg18[%c14, %c0_98], %120 {strides = array<i32>} : memref<18x256xf32, #tpu.memory_space<vmem>>, vector<2x256xf32>,
    %c0_99 = arith.constant 0 : index
    %c145_100 = arith.constant 145 : index
    %122 = vector.load %arg17[%c0_99, %c145_100] : memref<2x512xf32, #tpu.memory_space<vmem>>, vector<2x256xf32>
    %123 = vector.broadcast %1 : vector<1x256xf32> to vector<2x256xf32>
    %124 = arith.mulf %122, %123 : vector<2x256xf32>
    %c16_101 = arith.constant 16 : index
    %c0_102 = arith.constant 0 : index
    %125 = vector.load %arg18[%c16_101, %c0_102] : memref<18x256xf32, #tpu.memory_space<vmem>>, vector<2x256xf32>
    tpu.vector_store %arg18[%c16_101, %c0_102], %124 {strides = array<i32>} : memref<18x256xf32, #tpu.memory_space<vmem>>, vector<2x256xf32>,
    %c0_103 = arith.constant 0 : index
    %c0_104 = arith.constant 0 : index
    %126 = vector.load %arg10[%c0_103, %c0_104] : memref<16x18xf32, #tpu.memory_space<vmem>>, vector<16x18xf32>
    %c0_105 = arith.constant 0 : index
    %c0_106 = arith.constant 0 : index
    %127 = vector.load %arg18[%c0_105, %c0_106] : memref<18x256xf32, #tpu.memory_space<vmem>>, vector<18x256xf32>
    %cst_107 = arith.constant dense<0.000000e+00> : vector<16x256xf32>
    %128 = tpu.matmul %126, %127, %cst_107 {dimension_numbers = #tpu.dot_dimension_numbers<[1], [0], [0], [1], [0, 0, 1, 1], [], []>} : vector<16x18xf32>, vector<18x256xf32>, vector<16x256xf32> -> vector<16x256xf32>
    %c0_108 = arith.constant 0 : index
    %c0_109 = arith.constant 0 : index
    %129 = vector.load %arg11[%c0_108, %c0_109] : memref<16x1xf32, #tpu.memory_space<vmem>>, vector<16x1xf32>
    %130 = vector.broadcast %129 : vector<16x1xf32> to vector<16x256xf32>
    %131 = arith.addf %128, %130 : vector<16x256xf32>
    %cst_110 = arith.constant 0.000000e+00 : f32
    %132 = vector.broadcast %cst_110 : f32 to vector<16x256xf32>
    %133 = arith.maximumf %131, %132 : vector<16x256xf32>
    %cst_111 = arith.constant 0.000000e+00 : f32
    %134 = vector.broadcast %cst_111 : f32 to vector<16x128xf32>
    %c0_112 = arith.constant 0 : index
    %c0_113 = arith.constant 0 : index
    %135 = vector.load %arg19[%c0_112, %c0_113] : memref<16x512xf32, #tpu.memory_space<vmem>>, vector<16x128xf32>
    tpu.vector_store %arg19[%c0_112, %c0_113], %134 {strides = array<i32>} : memref<16x512xf32, #tpu.memory_space<vmem>>, vector<16x128xf32>,
    %cst_114 = arith.constant 0.000000e+00 : f32
    %136 = vector.broadcast %cst_114 : f32 to vector<16x128xf32>
    %c0_115 = arith.constant 0 : index
    %c384_116 = arith.constant 384 : index
    %137 = vector.load %arg19[%c0_115, %c384_116] : memref<16x512xf32, #tpu.memory_space<vmem>>, vector<16x128xf32>
    tpu.vector_store %arg19[%c0_115, %c384_116], %136 {strides = array<i32>} : memref<16x512xf32, #tpu.memory_space<vmem>>, vector<16x128xf32>,
    %c0_117 = arith.constant 0 : index
    %c128_118 = arith.constant 128 : index
    %138 = vector.load %arg19[%c0_117, %c128_118] : memref<16x512xf32, #tpu.memory_space<vmem>>, vector<16x256xf32>
    tpu.vector_store %arg19[%c0_117, %c128_118], %133 {strides = array<i32>} : memref<16x512xf32, #tpu.memory_space<vmem>>, vector<16x256xf32>,
    %c0_119 = arith.constant 0 : index
    %c111_120 = arith.constant 111 : index
    %139 = vector.load %arg19[%c0_119, %c111_120] : memref<16x512xf32, #tpu.memory_space<vmem>>, vector<16x256xf32>
    %140 = vector.broadcast %0 : vector<1x256xf32> to vector<16x256xf32>
    %141 = arith.mulf %139, %140 : vector<16x256xf32>
    %c0_121 = arith.constant 0 : index
    %c0_122 = arith.constant 0 : index
    %142 = vector.load %arg20[%c0_121, %c0_122] : memref<144x256xf32, #tpu.memory_space<vmem>>, vector<16x256xf32>
    tpu.vector_store %arg20[%c0_121, %c0_122], %141 {strides = array<i32>} : memref<144x256xf32, #tpu.memory_space<vmem>>, vector<16x256xf32>,
    %c0_123 = arith.constant 0 : index
    %c112_124 = arith.constant 112 : index
    %143 = vector.load %arg19[%c0_123, %c112_124] : memref<16x512xf32, #tpu.memory_space<vmem>>, vector<16x256xf32>
    %c16_125 = arith.constant 16 : index
    %c0_126 = arith.constant 0 : index
    %144 = vector.load %arg20[%c16_125, %c0_126] : memref<144x256xf32, #tpu.memory_space<vmem>>, vector<16x256xf32>
    tpu.vector_store %arg20[%c16_125, %c0_126], %143 {strides = array<i32>} : memref<144x256xf32, #tpu.memory_space<vmem>>, vector<16x256xf32>,
    %c0_127 = arith.constant 0 : index
    %c113_128 = arith.constant 113 : index
    %145 = vector.load %arg19[%c0_127, %c113_128] : memref<16x512xf32, #tpu.memory_space<vmem>>, vector<16x256xf32>
    %146 = vector.broadcast %1 : vector<1x256xf32> to vector<16x256xf32>
    %147 = arith.mulf %145, %146 : vector<16x256xf32>
    %c32_129 = arith.constant 32 : index
    %c0_130 = arith.constant 0 : index
    %148 = vector.load %arg20[%c32_129, %c0_130] : memref<144x256xf32, #tpu.memory_space<vmem>>, vector<16x256xf32>
    tpu.vector_store %arg20[%c32_129, %c0_130], %147 {strides = array<i32>} : memref<144x256xf32, #tpu.memory_space<vmem>>, vector<16x256xf32>,
    %c0_131 = arith.constant 0 : index
    %c127_132 = arith.constant 127 : index
    %149 = vector.load %arg19[%c0_131, %c127_132] : memref<16x512xf32, #tpu.memory_space<vmem>>, vector<16x256xf32>
    %150 = vector.broadcast %0 : vector<1x256xf32> to vector<16x256xf32>
    %151 = arith.mulf %149, %150 : vector<16x256xf32>
    %c48 = arith.constant 48 : index
    %c0_133 = arith.constant 0 : index
    %152 = vector.load %arg20[%c48, %c0_133] : memref<144x256xf32, #tpu.memory_space<vmem>>, vector<16x256xf32>
    tpu.vector_store %arg20[%c48, %c0_133], %151 {strides = array<i32>} : memref<144x256xf32, #tpu.memory_space<vmem>>, vector<16x256xf32>,
    %c0_134 = arith.constant 0 : index
    %c128_135 = arith.constant 128 : index
    %153 = vector.load %arg19[%c0_134, %c128_135] : memref<16x512xf32, #tpu.memory_space<vmem>>, vector<16x256xf32>
    %c64 = arith.constant 64 : index
    %c0_136 = arith.constant 0 : index
    %154 = vector.load %arg20[%c64, %c0_136] : memref<144x256xf32, #tpu.memory_space<vmem>>, vector<16x256xf32>
    tpu.vector_store %arg20[%c64, %c0_136], %153 {strides = array<i32>} : memref<144x256xf32, #tpu.memory_space<vmem>>, vector<16x256xf32>,
    %c0_137 = arith.constant 0 : index
    %c129_138 = arith.constant 129 : index
    %155 = vector.load %arg19[%c0_137, %c129_138] : memref<16x512xf32, #tpu.memory_space<vmem>>, vector<16x256xf32>
    %156 = vector.broadcast %1 : vector<1x256xf32> to vector<16x256xf32>
    %157 = arith.mulf %155, %156 : vector<16x256xf32>
    %c80 = arith.constant 80 : index
    %c0_139 = arith.constant 0 : index
    %158 = vector.load %arg20[%c80, %c0_139] : memref<144x256xf32, #tpu.memory_space<vmem>>, vector<16x256xf32>
    tpu.vector_store %arg20[%c80, %c0_139], %157 {strides = array<i32>} : memref<144x256xf32, #tpu.memory_space<vmem>>, vector<16x256xf32>,
    %c0_140 = arith.constant 0 : index
    %c143_141 = arith.constant 143 : index
    %159 = vector.load %arg19[%c0_140, %c143_141] : memref<16x512xf32, #tpu.memory_space<vmem>>, vector<16x256xf32>
    %160 = vector.broadcast %0 : vector<1x256xf32> to vector<16x256xf32>
    %161 = arith.mulf %159, %160 : vector<16x256xf32>
    %c96 = arith.constant 96 : index
    %c0_142 = arith.constant 0 : index
    %162 = vector.load %arg20[%c96, %c0_142] : memref<144x256xf32, #tpu.memory_space<vmem>>, vector<16x256xf32>
    tpu.vector_store %arg20[%c96, %c0_142], %161 {strides = array<i32>} : memref<144x256xf32, #tpu.memory_space<vmem>>, vector<16x256xf32>,
    %c0_143 = arith.constant 0 : index
    %c144_144 = arith.constant 144 : index
    %163 = vector.load %arg19[%c0_143, %c144_144] : memref<16x512xf32, #tpu.memory_space<vmem>>, vector<16x256xf32>
    %c112_145 = arith.constant 112 : index
    %c0_146 = arith.constant 0 : index
    %164 = vector.load %arg20[%c112_145, %c0_146] : memref<144x256xf32, #tpu.memory_space<vmem>>, vector<16x256xf32>
    tpu.vector_store %arg20[%c112_145, %c0_146], %163 {strides = array<i32>} : memref<144x256xf32, #tpu.memory_space<vmem>>, vector<16x256xf32>,
    %c0_147 = arith.constant 0 : index
    %c145_148 = arith.constant 145 : index
    %165 = vector.load %arg19[%c0_147, %c145_148] : memref<16x512xf32, #tpu.memory_space<vmem>>, vector<16x256xf32>
    %166 = vector.broadcast %1 : vector<1x256xf32> to vector<16x256xf32>
    %167 = arith.mulf %165, %166 : vector<16x256xf32>
    %c128_149 = arith.constant 128 : index
    %c0_150 = arith.constant 0 : index
    %168 = vector.load %arg20[%c128_149, %c0_150] : memref<144x256xf32, #tpu.memory_space<vmem>>, vector<16x256xf32>
    tpu.vector_store %arg20[%c128_149, %c0_150], %167 {strides = array<i32>} : memref<144x256xf32, #tpu.memory_space<vmem>>, vector<16x256xf32>,
    %c0_151 = arith.constant 0 : index
    %c0_152 = arith.constant 0 : index
    %169 = vector.load %arg12[%c0_151, %c0_152] : memref<1x144xf32, #tpu.memory_space<vmem>>, vector<1x144xf32>
    %c0_153 = arith.constant 0 : index
    %c0_154 = arith.constant 0 : index
    %170 = vector.load %arg20[%c0_153, %c0_154] : memref<144x256xf32, #tpu.memory_space<vmem>>, vector<144x256xf32>
    %cst_155 = arith.constant dense<0.000000e+00> : vector<1x256xf32>
    %171 = tpu.matmul %169, %170, %cst_155 {dimension_numbers = #tpu.dot_dimension_numbers<[1], [0], [0], [1], [0, 0, 1, 1], [], []>} : vector<1x144xf32>, vector<144x256xf32>, vector<1x256xf32> -> vector<1x256xf32>
    %c0_156 = arith.constant 0 : index
    %c0_157 = arith.constant 0 : index
    %172 = vector.load %arg13[%c0_156, %c0_157] : memref<1x1xf32, #tpu.memory_space<vmem>>, vector<1x1xf32>
    %173 = vector.broadcast %172 : vector<1x1xf32> to vector<1x256xf32>
    %174 = arith.addf %171, %173 : vector<1x256xf32>
    %cst_158 = arith.constant 0.000000e+00 : f32
    %175 = vector.broadcast %cst_158 : f32 to vector<1x256xf32>
    %176 = arith.subf %175, %174 : vector<1x256xf32>
    %177 = math.exp %176 : vector<1x256xf32>
    %cst_159 = arith.constant 1.000000e+00 : f32
    %178 = vector.broadcast %cst_159 : f32 to vector<1x256xf32>
    %179 = arith.addf %178, %177 : vector<1x256xf32>
    %cst_160 = arith.constant 1.000000e+00 : f32
    %180 = vector.broadcast %cst_160 : f32 to vector<1x256xf32>
    %181 = arith.divf %180, %179 : vector<1x256xf32>
    %182 = vector.broadcast %181 : vector<1x256xf32> to vector<4x256xf32>
    %183 = arith.mulf %83, %182 : vector<4x256xf32>
    %c0_161 = arith.constant 0 : index
    %c0_162 = arith.constant 0 : index
    %c0_163 = arith.constant 0 : index
    %184 = vector.load %arg14[%c0_161, %c0_162, %c0_163] : memref<1x4x256xf32, #tpu.memory_space<vmem>>, vector<1x4x256xf32>
    %185 = vector.shape_cast %184 : vector<1x4x256xf32> to vector<4x256xf32>
    %186 = vector.shape_cast %183 : vector<4x256xf32> to vector<1x4x256xf32>
    tpu.vector_store %arg14[%c0_161, %c0_162, %c0_163], %186 {strides = array<i32>} : memref<1x4x256xf32, #tpu.memory_space<vmem>>, vector<1x4x256xf32>,
    return
  }
  func.func @transform_0(%arg0: i32) -> (i32, i32) {
    %c0_i32 = arith.constant 0 : i32
    %c0_i32_0 = arith.constant 0 : i32
    %c0_i32_1 = arith.constant 0 : i32
    return %c0_i32, %c0_i32_0 : i32, i32
  }
  func.func @transform_1(%arg0: i32) -> (i32, i32) {
    %c0_i32 = arith.constant 0 : i32
    %c0_i32_0 = arith.constant 0 : i32
    %c0_i32_1 = arith.constant 0 : i32
    return %c0_i32, %c0_i32_0 : i32, i32
  }
  func.func @transform_2(%arg0: i32) -> (i32, i32, i32) {
    %c0_i32 = arith.constant 0 : i32
    %c0_i32_0 = arith.constant 0 : i32
    %c0_i32_1 = arith.constant 0 : i32
    return %arg0, %c0_i32, %c0_i32_0 : i32, i32, i32
  }
  func.func @transform_3(%arg0: i32) -> (i32, i32) {
    %c0_i32 = arith.constant 0 : i32
    %c0_i32_0 = arith.constant 0 : i32
    %c0_i32_1 = arith.constant 0 : i32
    return %c0_i32, %c0_i32_0 : i32, i32
  }
  func.func @transform_4(%arg0: i32) -> (i32, i32) {
    %c0_i32 = arith.constant 0 : i32
    %c0_i32_0 = arith.constant 0 : i32
    %c0_i32_1 = arith.constant 0 : i32
    return %c0_i32, %c0_i32_0 : i32, i32
  }
  func.func @transform_5(%arg0: i32) -> (i32, i32) {
    %c0_i32 = arith.constant 0 : i32
    %c0_i32_0 = arith.constant 0 : i32
    %c0_i32_1 = arith.constant 0 : i32
    return %c0_i32, %c0_i32_0 : i32, i32
  }
  func.func @transform_6(%arg0: i32) -> (i32, i32) {
    %c0_i32 = arith.constant 0 : i32
    %c0_i32_0 = arith.constant 0 : i32
    %c0_i32_1 = arith.constant 0 : i32
    return %c0_i32, %c0_i32_0 : i32, i32
  }
  func.func @transform_7(%arg0: i32) -> (i32, i32) {
    %c0_i32 = arith.constant 0 : i32
    %c0_i32_0 = arith.constant 0 : i32
    %c0_i32_1 = arith.constant 0 : i32
    return %c0_i32, %c0_i32_0 : i32, i32
  }
  func.func @transform_8(%arg0: i32) -> (i32, i32) {
    %c0_i32 = arith.constant 0 : i32
    %c0_i32_0 = arith.constant 0 : i32
    %c0_i32_1 = arith.constant 0 : i32
    return %c0_i32, %c0_i32_0 : i32, i32
  }
  func.func @transform_9(%arg0: i32) -> (i32, i32) {
    %c0_i32 = arith.constant 0 : i32
    %c0_i32_0 = arith.constant 0 : i32
    %c0_i32_1 = arith.constant 0 : i32
    return %c0_i32, %c0_i32_0 : i32, i32
  }
  func.func @transform_10(%arg0: i32) -> (i32, i32) {
    %c0_i32 = arith.constant 0 : i32
    %c0_i32_0 = arith.constant 0 : i32
    %c0_i32_1 = arith.constant 0 : i32
    return %c0_i32, %c0_i32_0 : i32, i32
  }
  func.func @transform_11(%arg0: i32) -> (i32, i32) {
    %c0_i32 = arith.constant 0 : i32
    %c0_i32_0 = arith.constant 0 : i32
    %c0_i32_1 = arith.constant 0 : i32
    return %c0_i32, %c0_i32_0 : i32, i32
  }
  func.func @transform_12(%arg0: i32) -> (i32, i32) {
    %c0_i32 = arith.constant 0 : i32
    %c0_i32_0 = arith.constant 0 : i32
    %c0_i32_1 = arith.constant 0 : i32
    return %c0_i32, %c0_i32_0 : i32, i32
  }
  func.func @transform_13(%arg0: i32) -> (i32, i32, i32) {
    %c0_i32 = arith.constant 0 : i32
    %c0_i32_0 = arith.constant 0 : i32
    %c0_i32_1 = arith.constant 0 : i32
    return %arg0, %c0_i32, %c0_i32_0 : i32, i32, i32
  }
}

</mosaic_0001>

<llo_original>
// kernel: cbam_forward.1
$region0: #{cbam_forward.1}
  #allocation0 [shape = 'u32[]', space=smem, size = 0x4, offset = 0x4, fixed_abs, tag = 'smem constant byte address 0x4 - core index']
  #allocation1 [shape = 'u32[144,128]{1,0:T(1,128)}', space=vmem, size = 0x12000, scoped, tag = 'internal scratch']
  #allocation2 [shape = 'f32[4,512]{1,0:T(4,128)}', space=vmem, size = 0x2000, scoped, tag = 'scratch operand']
  #allocation3 [shape = 'f32[36,256]{1,0:T(8,128)}', space=vmem, size = 0xa000, scoped, tag = 'scratch operand']
  #allocation4 [shape = 'f32[2,512]{1,0:T(2,128)}', space=vmem, size = 0x1000, scoped, tag = 'scratch operand']
  #allocation5 [shape = 'f32[18,256]{1,0:T(8,128)}', space=vmem, size = 0x6000, scoped, tag = 'scratch operand']
  #allocation6 [shape = 'f32[16,512]{1,0:T(8,128)}', space=vmem, size = 0x8000, scoped, tag = 'scratch operand']
  #allocation7 [shape = 'f32[144,256]{1,0:T(8,128)}', space=vmem, size = 0x24000, scoped, tag = 'scratch operand']
  #allocation8 [shape = 'f32[1,1]{1,0:T(1,128)S(1)}', space=vmem, size = 0x200, scoped, tag = 'scoped memory for cbam_forward.1']
  %s0 = inlined_call_operand.vmem [shape: f32[2,256], index: 0, kind: input, shape index: {}]
  %s1 = inlined_call_operand.vmem [shape: f32[1,2], index: 1, kind: input, shape index: {}]
  %s2 = inlined_call_operand.vmem [shape: f32[2,4,256], index: 2, kind: input, shape index: {}]
  %s3 = inlined_call_operand.vmem [shape: f32[4,36], index: 3, kind: input, shape index: {}]
  %s4 = inlined_call_operand.vmem [shape: f32[4,1], index: 4, kind: input, shape index: {}]
  %s5 = inlined_call_operand.vmem [shape: f32[4,4], index: 5, kind: input, shape index: {}]
  %s6 = inlined_call_operand.vmem [shape: f32[4,1], index: 6, kind: input, shape index: {}]
  %s7 = inlined_call_operand.vmem [shape: f32[4,4], index: 7, kind: input, shape index: {}]
  %s8 = inlined_call_operand.vmem [shape: f32[4,1], index: 8, kind: input, shape index: {}]
  %s9 = inlined_call_operand.vmem [shape: f32[16,18], index: 9, kind: input, shape index: {}]
  %s10 = inlined_call_operand.vmem [shape: f32[16,1], index: 10, kind: input, shape index: {}]
  %s11 = inlined_call_operand.vmem [shape: f32[1,144], index: 11, kind: input, shape index: {}]
  %s12 = inlined_call_operand.<no memory space> [shape: f32[1,1], index: 12, kind: input, shape index: {}]
  %s13 = inlined_call_operand.vmem [shape: f32[2,4,256], index: 13, kind: output, shape index: {}]
  %s14 = sld [smem:[#allocation0]]
  $region85: #{cbam_forward.1} parent=0
    _
  %s16 = ssub.s32 1, %s14
  %s17 = scalar_select 0, %s16, %s14
  %v18 = vstv %s12
  %19 = vst [vmem:[#allocation8] sm:$0x1] %v18
  loop: start=0, step=1, limit=4
  $region2: #{cbam_forward.1} parent=0 // loop_pre_header
    _
  $region3: #{cbam_forward.1} parent=0 // loop_header
    %s21 = sphi 0, %s25
    %p22 = scmp.ge.s32.totalorder %s21, 4
    %s29 = sphi 0, %s29
    %s31 = sphi 0, %s29
    %s32 = sphi 0, %s31
    %s46 = sphi 0, %s32
    %s50 = sphi 0, %s50
    %s52 = sphi 0, %s50
    %s53 = sphi 0, %s52
    %s67 = sphi 0, %s53
    %s73 = sphi 0, %s75
    %s76 = sphi 0, %s73
    %s77 = sphi 0, %s76
    %s93 = sphi 0, %s77
    %s97 = sphi 0, %s97
    %s99 = sphi 0, %s97
    %s100 = sphi 0, %s99
    %s114 = sphi 0, %s100
    %s118 = sphi 0, %s118
    %s120 = sphi 0, %s118
    %s121 = sphi 0, %s120
    %s135 = sphi 0, %s121
    %s139 = sphi 0, %s139
    %s141 = sphi 0, %s139
    %s142 = sphi 0, %s141
    %s156 = sphi 0, %s142
    %s160 = sphi 0, %s160
    %s162 = sphi 0, %s160
    %s163 = sphi 0, %s162
    %s177 = sphi 0, %s163
    %s181 = sphi 0, %s181
    %s183 = sphi 0, %s181
    %s184 = sphi 0, %s183
    %s198 = sphi 0, %s184
    %s202 = sphi 0, %s202
    %s204 = sphi 0, %s202
    %s205 = sphi 0, %s204
    %s219 = sphi 0, %s205
    %s223 = sphi 0, %s223
    %s225 = sphi 0, %s223
    %s226 = sphi 0, %s225
    %s240 = sphi 0, %s226
    %s244 = sphi 0, %s244
    %s246 = sphi 0, %s244
    %s247 = sphi 0, %s246
    %s261 = sphi 0, %s247
    %s265 = sphi 0, %s265
    %s267 = sphi 0, %s265
    %s268 = sphi 0, %s267
    %s282 = sphi 0, %s268
    %s286 = sphi 0, %s286
    %s288 = sphi 0, %s286
    %s289 = sphi 0, %s288
    %s303 = sphi 0, %s289
    %s309 = sphi 0, %s311
    %s312 = sphi 0, %s309
    %s313 = sphi 0, %s312
    %s329 = sphi 0, %s313
  $region4: #{cbam_forward.1} parent=0 // loop_header_branch
    %24 = sbr.rel (%p22) target = $region8
  $region5: #{cbam_forward.1} parent=0 // loop_body
    %s26 = ssub.s32 %s21, 1
    %s27 = ssub.s32 %s21, 2
    %s28 = sadd.s32 %s21, 1
    %s30 = sadd.s32 %s29, 1
    %p33 = scmp.eq.s32.totalorder %s21, 1
    %p34 = scmp.ne.s32.totalorder %s29, %s31
    %p35 = scmp.eq.s32.totalorder %s21, 0
    %p36 = por %p34, %p35
    %p37 = scmp.ne.s32.totalorder %s29, %s31
    %p38 = scmp.eq.s32.totalorder %s26, 1
    %p39 = por %p37, %p38
    %p40 = scmp.ne.s32.totalorder %s31, %s32
    %p41 = scmp.eq.s32.totalorder %s26, 0
    %p42 = por %p40, %p41
    %p43 = scmp.ne.s32.totalorder %s31, %s32
    %p44 = scmp.eq.s32.totalorder %s27, 1
    %p45 = por %p43, %p44
    %p47 = scmp.ne.s32.totalorder %s32, %s46
    %p48 = scmp.eq.s32.totalorder %s27, 0
    %p49 = por %p47, %p48
    %s51 = sadd.s32 %s50, 1
    %p54 = scmp.eq.s32.totalorder %s21, 1
    %p55 = scmp.ne.s32.totalorder %s50, %s52
    %p56 = scmp.eq.s32.totalorder %s21, 0
    %p57 = por %p55, %p56
    %p58 = scmp.ne.s32.totalorder %s50, %s52
    %p59 = scmp.eq.s32.totalorder %s26, 1
    %p60 = por %p58, %p59
    %p61 = scmp.ne.s32.totalorder %s52, %s53
    %p62 = scmp.eq.s32.totalorder %s26, 0
    %p63 = por %p61, %p62
    %p64 = scmp.ne.s32.totalorder %s52, %s53
    %p65 = scmp.eq.s32.totalorder %s27, 1
    %p66 = por %p64, %p65
    %p68 = scmp.ne.s32.totalorder %s53, %s67
    %p69 = scmp.eq.s32.totalorder %s27, 0
    %p70 = por %p68, %p69
    %s71 = ssub.s32 %s21, %s28
    %p72 = scmp.eq.s32.totalorder %s71, 0
    %s74 = sadd.s32 %s73, 1
    %s75 = scalar_select %p72, %s73, %s74
    %p78 = pneg %p72
    %p79 = scmp.eq.s32.totalorder %s21, 1
    %p80 = por %p78, %p79
    %p81 = scmp.ne.s32.totalorder %s73, %s76
    %p82 = scmp.eq.s32.totalorder %s21, 0
    %p83 = por %p81, %p82
    %p84 = scmp.ne.s32.totalorder %s73, %s76
    %p85 = scmp.eq.s32.totalorder %s26, 1
    %p86 = por %p84, %p85
    %p87 = scmp.ne.s32.totalorder %s76, %s77
    %p88 = scmp.eq.s32.totalorder %s26, 0
    %p89 = por %p87, %p88
    %p90 = scmp.ne.s32.totalorder %s76, %s77
    %p91 = scmp.eq.s32.totalorder %s27, 1
    %p92 = por %p90, %p91
    %p94 = scmp.ne.s32.totalorder %s77, %s93
    %p95 = scmp.eq.s32.totalorder %s27, 0
    %p96 = por %p94, %p95
    %s98 = sadd.s32 %s97, 1
    %p101 = scmp.eq.s32.totalorder %s21, 1
    %p102 = scmp.ne.s32.totalorder %s97, %s99
    %p103 = scmp.eq.s32.totalorder %s21, 0
    %p104 = por %p102, %p103
    %p105 = scmp.ne.s32.totalorder %s97, %s99
    %p106 = scmp.eq.s32.totalorder %s26, 1
    %p107 = por %p105, %p106
    %p108 = scmp.ne.s32.totalorder %s99, %s100
    %p109 = scmp.eq.s32.totalorder %s26, 0
    %p110 = por %p108, %p109
    %p111 = scmp.ne.s32.totalorder %s99, %s100
    %p112 = scmp.eq.s32.totalorder %s27, 1
    %p113 = por %p111, %p112
    %p115 = scmp.ne.s32.totalorder %s100, %s114
    %p116 = scmp.eq.s32.totalorder %s27, 0
    %p117 = por %p115, %p116
    %s119 = sadd.s32 %s118, 1
    %p122 = scmp.eq.s32.totalorder %s21, 1
    %p123 = scmp.ne.s32.totalorder %s118, %s120
    %p124 = scmp.eq.s32.totalorder %s21, 0
    %p125 = por %p123, %p124
    %p126 = scmp.ne.s32.totalorder %s118, %s120
    %p127 = scmp.eq.s32.totalorder %s26, 1
    %p128 = por %p126, %p127
    %p129 = scmp.ne.s32.totalorder %s120, %s121
    %p130 = scmp.eq.s32.totalorder %s26, 0
    %p131 = por %p129, %p130
    %p132 = scmp.ne.s32.totalorder %s120, %s121
    %p133 = scmp.eq.s32.totalorder %s27, 1
    %p134 = por %p132, %p133
    %p136 = scmp.ne.s32.totalorder %s121, %s135
    %p137 = scmp.eq.s32.totalorder %s27, 0
    %p138 = por %p136, %p137
    %s140 = sadd.s32 %s139, 1
    %p143 = scmp.eq.s32.totalorder %s21, 1
    %p144 = scmp.ne.s32.totalorder %s139, %s141
    %p145 = scmp.eq.s32.totalorder %s21, 0
    %p146 = por %p144, %p145
    %p147 = scmp.ne.s32.totalorder %s139, %s141
    %p148 = scmp.eq.s32.totalorder %s26, 1
    %p149 = por %p147, %p148
    %p150 = scmp.ne.s32.totalorder %s141, %s142
    %p151 = scmp.eq.s32.totalorder %s26, 0
    %p152 = por %p150, %p151
    %p153 = scmp.ne.s32.totalorder %s141, %s142
    %p154 = scmp.eq.s32.totalorder %s27, 1
    %p155 = por %p153, %p154
    %p157 = scmp.ne.s32.totalorder %s142, %s156
    %p158 = scmp.eq.s32.totalorder %s27, 0
    %p159 = por %p157, %p158
    %s161 = sadd.s32 %s160, 1
    %p164 = scmp.eq.s32.totalorder %s21, 1
    %p165 = scmp.ne.s32.totalorder %s160, %s162
    %p166 = scmp.eq.s32.totalorder %s21, 0
    %p167 = por %p165, %p166
    %p168 = scmp.ne.s32.totalorder %s160, %s162
    %p169 = scmp.eq.s32.totalorder %s26, 1
    %p170 = por %p168, %p169
    %p171 = scmp.ne.s32.totalorder %s162, %s163
    %p172 = scmp.eq.s32.totalorder %s26, 0
    %p173 = por %p171, %p172
    %p174 = scmp.ne.s32.totalorder %s162, %s163
    %p175 = scmp.eq.s32.totalorder %s27, 1
    %p176 = por %p174, %p175
    %p178 = scmp.ne.s32.totalorder %s163, %s177
    %p179 = scmp.eq.s32.totalorder %s27, 0
    %p180 = por %p178, %p179
    %s182 = sadd.s32 %s181, 1
    %p185 = scmp.eq.s32.totalorder %s21, 1
    %p186 = scmp.ne.s32.totalorder %s181, %s183
    %p187 = scmp.eq.s32.totalorder %s21, 0
    %p188 = por %p186, %p187
    %p189 = scmp.ne.s32.totalorder %s181, %s183
    %p190 = scmp.eq.s32.totalorder %s26, 1
    %p191 = por %p189, %p190
    %p192 = scmp.ne.s32.totalorder %s183, %s184
    %p193 = scmp.eq.s32.totalorder %s26, 0
    %p194 = por %p192, %p193
    %p195 = scmp.ne.s32.totalorder %s183, %s184
    %p196 = scmp.eq.s32.totalorder %s27, 1
    %p197 = por %p195, %p196
    %p199 = scmp.ne.s32.totalorder %s184, %s198
    %p200 = scmp.eq.s32.totalorder %s27, 0
    %p201 = por %p199, %p200
    %s203 = sadd.s32 %s202, 1
    %p206 = scmp.eq.s32.totalorder %s21, 1
    %p207 = scmp.ne.s32.totalorder %s202, %s204
    %p208 = scmp.eq.s32.totalorder %s21, 0
    %p209 = por %p207, %p208
    %p210 = scmp.ne.s32.totalorder %s202, %s204
    %p211 = scmp.eq.s32.totalorder %s26, 1
    %p212 = por %p210, %p211
    %p213 = scmp.ne.s32.totalorder %s204, %s205
    %p214 = scmp.eq.s32.totalorder %s26, 0
    %p215 = por %p213, %p214
    %p216 = scmp.ne.s32.totalorder %s204, %s205
    %p217 = scmp.eq.s32.totalorder %s27, 1
    %p218 = por %p216, %p217
    %p220 = scmp.ne.s32.totalorder %s205, %s219
    %p221 = scmp.eq.s32.totalorder %s27, 0
    %p222 = por %p220, %p221
    %s224 = sadd.s32 %s223, 1
    %p227 = scmp.eq.s32.totalorder %s21, 1
    %p228 = scmp.ne.s32.totalorder %s223, %s225
    %p229 = scmp.eq.s32.totalorder %s21, 0
    %p230 = por %p228, %p229
    %p231 = scmp.ne.s32.totalorder %s223, %s225
    %p232 = scmp.eq.s32.totalorder %s26, 1
    %p233 = por %p231, %p232
    %p234 = scmp.ne.s32.totalorder %s225, %s226
    %p235 = scmp.eq.s32.totalorder %s26, 0
    %p236 = por %p234, %p235
    %p237 = scmp.ne.s32.totalorder %s225, %s226
    %p238 = scmp.eq.s32.totalorder %s27, 1
    %p239 = por %p237, %p238
    %p241 = scmp.ne.s32.totalorder %s226, %s240
    %p242 = scmp.eq.s32.totalorder %s27, 0
    %p243 = por %p241, %p242
    %s245 = sadd.s32 %s244, 1
    %p248 = scmp.eq.s32.totalorder %s21, 1
    %p249 = scmp.ne.s32.totalorder %s244, %s246
    %p250 = scmp.eq.s32.totalorder %s21, 0
    %p251 = por %p249, %p250
    %p252 = scmp.ne.s32.totalorder %s244, %s246
    %p253 = scmp.eq.s32.totalorder %s26, 1
    %p254 = por %p252, %p253
    %p255 = scmp.ne.s32.totalorder %s246, %s247
    %p256 = scmp.eq.s32.totalorder %s26, 0
    %p257 = por %p255, %p256
    %p258 = scmp.ne.s32.totalorder %s246, %s247
    %p259 = scmp.eq.s32.totalorder %s27, 1
    %p260 = por %p258, %p259
    %p262 = scmp.ne.s32.totalorder %s247, %s261
    %p263 = scmp.eq.s32.totalorder %s27, 0
    %p264 = por %p262, %p263
    %s266 = sadd.s32 %s265, 1
    %p269 = scmp.eq.s32.totalorder %s21, 1
    %p270 = scmp.ne.s32.totalorder %s265, %s267
    %p271 = scmp.eq.s32.totalorder %s21, 0
    %p272 = por %p270, %p271
    %p273 = scmp.ne.s32.totalorder %s265, %s267
    %p274 = scmp.eq.s32.totalorder %s26, 1
    %p275 = por %p273, %p274
    %p276 = scmp.ne.s32.totalorder %s267, %s268
    %p277 = scmp.eq.s32.totalorder %s26, 0
    %p278 = por %p276, %p277
    %p279 = scmp.ne.s32.totalorder %s267, %s268
    %p280 = scmp.eq.s32.totalorder %s27, 1
    %p281 = por %p279, %p280
    %p283 = scmp.ne.s32.totalorder %s268, %s282
    %p284 = scmp.eq.s32.totalorder %s27, 0
    %p285 = por %p283, %p284
    %s287 = sadd.s32 %s286, 1
    %p290 = scmp.eq.s32.totalorder %s21, 1
    %p291 = scmp.ne.s32.totalorder %s286, %s288
    %p292 = scmp.eq.s32.totalorder %s21, 0
    %p293 = por %p291, %p292
    %p294 = scmp.ne.s32.totalorder %s286, %s288
    %p295 = scmp.eq.s32.totalorder %s26, 1
    %p296 = por %p294, %p295
    %p297 = scmp.ne.s32.totalorder %s288, %s289
    %p298 = scmp.eq.s32.totalorder %s26, 0
    %p299 = por %p297, %p298
    %p300 = scmp.ne.s32.totalorder %s288, %s289
    %p301 = scmp.eq.s32.totalorder %s27, 1
    %p302 = por %p300, %p301
    %p304 = scmp.ne.s32.totalorder %s289, %s303
    %p305 = scmp.eq.s32.totalorder %s27, 0
    %p306 = por %p304, %p305
    %s307 = ssub.s32 %s21, %s28
    %p308 = scmp.eq.s32.totalorder %s307, 0
    %s310 = sadd.s32 %s309, 1
    %s311 = scalar_select %p308, %s309, %s310
    %p314 = pneg %p308
    %p315 = scmp.eq.s32.totalorder %s21, 1
    %p316 = por %p314, %p315
    %p317 = scmp.ne.s32.totalorder %s309, %s312
    %p318 = scmp.eq.s32.totalorder %s21, 0
    %p319 = por %p317, %p318
    %p320 = scmp.ne.s32.totalorder %s309, %s312
    %p321 = scmp.eq.s32.totalorder %s26, 1
    %p322 = por %p320, %p321
    %p323 = scmp.ne.s32.totalorder %s312, %s313
    %p324 = scmp.eq.s32.totalorder %s26, 0
    %p325 = por %p323, %p324
    %p326 = scmp.ne.s32.totalorder %s312, %s313
    %p327 = scmp.eq.s32.totalorder %s27, 1
    %p328 = por %p326, %p327
    %p330 = scmp.ne.s32.totalorder %s313, %s329
    %p331 = scmp.eq.s32.totalorder %s27, 0
    %p332 = por %p330, %p331
    %p333 = scmp.le.s32.totalorder 1, %s21
    %p334 = scmp.lt.s32.totalorder %s21, 3
    %p335 = pnand %p333, %p334
    %p336 = pneg %p335
    // Predicated region
    $region9: #{cbam_forward.1} parent=5 // pred_check
      _
    $region10: #{cbam_forward.1} parent=5 // pred_check_branch
      %338 = sbr.rel (%p335) target = $region12
    $region11: #{cbam_forward.1} parent=5 // pred_region
      %s339 = ssub.s32 %s21, 1
      // Predicated region
      $region13: #{cbam_forward.1} parent=11 // pred_check
        %p340 = pneg %p42
      $region14: #{cbam_forward.1} parent=11 // pred_check_branch
        %342 = sbr.rel (%p340) target = $region16
      $region15: #{cbam_forward.1} parent=11 // pred_region
        _
      $region16: #{cbam_forward.1} parent=11 // pred_fallthru
        _
      // Predicated region
      $region17: #{cbam_forward.1} parent=11 // pred_check
        %p343 = pneg %p63
      $region18: #{cbam_forward.1} parent=11 // pred_check_branch
        %345 = sbr.rel (%p343) target = $region20
      $region19: #{cbam_forward.1} parent=11 // pred_region
        _
      $region20: #{cbam_forward.1} parent=11 // pred_fallthru
        _
      // Predicated region
      $region21: #{cbam_forward.1} parent=11 // pred_check
        %p346 = pneg %p110
      $region22: #{cbam_forward.1} parent=11 // pred_check_branch
        %348 = sbr.rel (%p346) target = $region24
      $region23: #{cbam_forward.1} parent=11 // pred_region
        _
      $region24: #{cbam_forward.1} parent=11 // pred_fallthru
        _
      // Predicated region
      $region25: #{cbam_forward.1} parent=11 // pred_check
        %p349 = pneg %p131
      $region26: #{cbam_forward.1} parent=11 // pred_check_branch
        %351 = sbr.rel (%p349) target = $region28
      $region27: #{cbam_forward.1} parent=11 // pred_region
        _
      $region28: #{cbam_forward.1} parent=11 // pred_fallthru
        _
      // Predicated region
      $region29: #{cbam_forward.1} parent=11 // pred_check
        %p352 = pneg %p152
      $region30: #{cbam_forward.1} parent=11 // pred_check_branch
        %354 = sbr.rel (%p352) target = $region32
      $region31: #{cbam_forward.1} parent=11 // pred_region
        _
      $region32: #{cbam_forward.1} parent=11 // pred_fallthru
        _
      // Predicated region
      $region33: #{cbam_forward.1} parent=11 // pred_check
        %p355 = pneg %p173
      $region34: #{cbam_forward.1} parent=11 // pred_check_branch
        %357 = sbr.rel (%p355) target = $region36
      $region35: #{cbam_forward.1} parent=11 // pred_region
        _
      $region36: #{cbam_forward.1} parent=11 // pred_fallthru
        _
      // Predicated region
      $region37: #{cbam_forward.1} parent=11 // pred_check
        %p358 = pneg %p194
      $region38: #{cbam_forward.1} parent=11 // pred_check_branch
        %360 = sbr.rel (%p358) target = $region40
      $region39: #{cbam_forward.1} parent=11 // pred_region
        _
      $region40: #{cbam_forward.1} parent=11 // pred_fallthru
        _
      // Predicated region
      $region41: #{cbam_forward.1} parent=11 // pred_check
        %p361 = pneg %p215
      $region42: #{cbam_forward.1} parent=11 // pred_check_branch
        %363 = sbr.rel (%p361) target = $region44
      $region43: #{cbam_forward.1} parent=11 // pred_region
        _
      $region44: #{cbam_forward.1} parent=11 // pred_fallthru
        _
      // Predicated region
      $region45: #{cbam_forward.1} parent=11 // pred_check
        %p364 = pneg %p236
      $region46: #{cbam_forward.1} parent=11 // pred_check_branch
        %366 = sbr.rel (%p364) target = $region48
      $region47: #{cbam_forward.1} parent=11 // pred_region
        _
      $region48: #{cbam_forward.1} parent=11 // pred_fallthru
        _
      // Predicated region
      $region49: #{cbam_forward.1} parent=11 // pred_check
        %p367 = pneg %p257
      $region50: #{cbam_forward.1} parent=11 // pred_check_branch
        %369 = sbr.rel (%p367) target = $region52
      $region51: #{cbam_forward.1} parent=11 // pred_region
        _
      $region52: #{cbam_forward.1} parent=11 // pred_fallthru
        _
      // Predicated region
      $region53: #{cbam_forward.1} parent=11 // pred_check
        %p370 = pneg %p278
      $region54: #{cbam_forward.1} parent=11 // pred_check_branch
        %372 = sbr.rel (%p370) target = $region56
      $region55: #{cbam_forward.1} parent=11 // pred_region
        _
      $region56: #{cbam_forward.1} parent=11 // pred_fallthru
        _
      // Predicated region
      $region57: #{cbam_forward.1} parent=11 // pred_check
        %p373 = pneg %p299
      $region58: #{cbam_forward.1} parent=11 // pred_check_branch
        %375 = sbr.rel (%p373) target = $region60
      $region59: #{cbam_forward.1} parent=11 // pred_region
        _
      $region60: #{cbam_forward.1} parent=11 // pred_fallthru
        _
    $region12: #{cbam_forward.1} parent=5 // pred_fallthru
      _
    %p376 = scmp.lt.s32.totalorder %s21, 2
    // Predicated region
    $region61: #{cbam_forward.1} parent=5 // pred_check
      %p377 = pneg %p376
    $region62: #{cbam_forward.1} parent=5 // pred_check_branch
      %379 = sbr.rel (%p377) target = $region64
    $region63: #{cbam_forward.1} parent=5 // pred_region
      // Predicated region
      $region65: #{cbam_forward.1} parent=63 // pred_check
        %p380 = pneg %p83
      $region66: #{cbam_forward.1} parent=63 // pred_check_branch
        %382 = sbr.rel (%p380) target = $region68
      $region67: #{cbam_forward.1} parent=63 // pred_region
        %p383 = scmp.lt.s32.totalorder %s21, 1
        %s384 = scalar_select %p383, %s21, 1
        %s385 = smul.addr %s384, 2
        %s386 = smul.addr %s385, 4
        %s387 = scalar_lea.vmem %s2, %s386
      $region68: #{cbam_forward.1} parent=63 // pred_fallthru
        _
    $region64: #{cbam_forward.1} parent=5 // pred_fallthru
      _
    %p388 = scmp.le.s32.totalorder 1, %s21
    %p389 = scmp.lt.s32.totalorder %s21, 3
    %p390 = pnand %p388, %p389
    %p391 = pneg %p390
    // Predicated region
    $region69: #{cbam_forward.1} parent=5 // pred_check
      _
    $region70: #{cbam_forward.1} parent=5 // pred_check_branch
      %393 = sbr.rel (%p390) target = $region72
    $region71: #{cbam_forward.1} parent=5 // pred_region
      %s394 = ssub.s32 %s21, 1
      %p395 = pneg %p42
      %p396 = pneg %p39
      %p397 = pneg %p63
      %p398 = pneg %p60
      %p399 = scmp.lt.s32.totalorder %s26, 1
      %s400 = scalar_select %p399, %s26, 1
      %s401 = smul.addr %s400, 2
      %s402 = smul.addr %s401, 4
      %s403 = scalar_lea.vmem %s2, %s402
      %p404 = pneg %p89
      %p405 = pneg %p86
      %p406 = pneg %p110
      %p407 = pneg %p107
      %p408 = pneg %p131
      %p409 = pneg %p128
      %p410 = pneg %p152
      %p411 = pneg %p149
      %p412 = pneg %p173
      %p413 = pneg %p170
      %p414 = pneg %p194
      %p415 = pneg %p191
      %p416 = pneg %p215
      %p417 = pneg %p212
      %p418 = pneg %p236
      %p419 = pneg %p233
      %p420 = pneg %p257
      %p421 = pneg %p254
      %p422 = pneg %p278
      %p423 = pneg %p275
      %p424 = pneg %p299
      %p425 = pneg %p296
      %p426 = pneg %p325
      %p427 = pneg %p322
      %p428 = scmp.lt.s32.totalorder %s26, 1
      %s429 = scalar_select %p428, %s26, 1
      %s430 = smul.addr %s429, 2
      %s431 = smul.addr %s430, 4
      %s432 = scalar_lea.vmem %s13, %s431
      %p433 = scmp.lt.s32.totalorder %s26, 1
      %s434 = scalar_select %p433, %s26, 1
      %s435 = smul.addr %s434, 2
      %s436 = smul.addr %s435, 4
      %s437 = scalar_lea.vmem %s2, %s436
      %p438 = scmp.lt.s32.totalorder %s26, 1
      %s439 = scalar_select %p438, %s26, 1
      %s440 = smul.addr %s439, 2
      %s441 = smul.addr %s440, 4
      %s442 = scalar_lea.vmem %s13, %s441
      %v443 = vld [vmem:[%s0] ss:$2 sm:$0x3]
      %s444 = scalar_lea.vmem %s0, 1
      %v445 = vld [vmem:[%s444] ss:$2 sm:$0x3]
      %v446 = vld [vmem:[%s437] sm:$0xff]
      %447 = vst [vmem:[#allocation2] sm:$0xf] 0.0
      %448 = vst [vmem:[#allocation2 + $0xc] sm:$0xf] 0.0
      %449 = vst [vmem:[#allocation2 + $0x4] sm:$0xff] %v446
      %v450 = vld [vmem:[#allocation2] sm:$0xff]
      %v451 = vld [vmem:[#allocation2 + $0x8] sm:$0xf]
      %v453 = vlaneseq
      %v454 = vshrl.u32 %v453, 7
      %v455 = vsub.s32 0, %v454
      %v456 = vrot.slane %v443, %v455
      %v457 = vlaneseq
      %v458 = vshrl.u32 %v457, 7
      %v459 = vsub.s32 1, %v458
      %v460 = vrot.slane %v443, %v459
      %v461 = vcombine.low %v456, %v460
      %462 = vrot.lane.b32.xlu0 %v461, 111
      %v463 = vpop.permute.xlu0 %462
      %v464 = vrot.slane %v463, 4
      %vm465 = vcmask 908288
      %v466 = vsel %vm465, %v464, %v463
      %v469 = vmul.f32 %v450, %v466
      %v470 = vmul.f32 %v451, %v464
      %v473 = vcombine.high %v469, %v469
      %474 = vrot.lane.b32.xlu0 %v469, 17
      %v475 = vpop.permute.xlu0 %474
      %476 = vrot.lane.b32.xlu0 %v473, 17
      %v477 = vpop.permute.xlu0 %476
      %478 = vrot.lane.b32.xlu0 %v470, 17
      %v479 = vpop.permute.xlu0 %478
      %vm480 = vcmask 138240
      %v481 = vsel %vm480, %v475, %v477
      %v482 = vsel %vm480, %v477, %v479
      %485 = vst [vmem:[#allocation3] sm:$0xf] %v481
      %486 = vst [vmem:[#allocation3 + $0x8] sm:$0xf] %v482
      %v487 = vld [vmem:[#allocation2] sm:$0xff]
      %v488 = vld [vmem:[#allocation2 + $0x8] sm:$0xf]
      %v491 = vcombine.low %v487, %v487
      %v492 = vcombine.low %v488, %v488
      %493 = vrot.lane.b32.xlu0 %v491, 16
      %v494 = vpop.permute.xlu0 %493
      %495 = vrot.lane.b32.xlu0 %v487, 16
      %v496 = vpop.permute.xlu0 %495
      %497 = vrot.lane.b32.xlu0 %v492, 16
      %v498 = vpop.permute.xlu0 %497
      %vm499 = vcmask 130048
      %v500 = vsel %vm499, %v494, %v496
      %v501 = vsel %vm499, %v496, %v498
      %504 = vst [vmem:[#allocation3] sm:$0xf0] %v500
      %505 = vst [vmem:[#allocation3 + $0x8] sm:$0xf0] %v501
      %v506 = vld [vmem:[#allocation2] sm:$0xff]
      %v507 = vld [vmem:[#allocation2 + $0x8] sm:$0xf]
      %v509 = vlaneseq
      %v510 = vshrl.u32 %v509, 7
      %v511 = vsub.s32 0, %v510
      %v512 = vrot.slane %v445, %v511
      %v513 = vlaneseq
      %v514 = vshrl.u32 %v513, 7
      %v515 = vsub.s32 1, %v514
      %v516 = vrot.slane %v445, %v515
      %v517 = vcombine.low %v512, %v516
      %518 = vrot.lane.b32.xlu0 %v517, 113
      %v519 = vpop.permute.xlu0 %518
      %v520 = vrot.slane %v519, 4
      %vm521 = vcmask 924672
      %v522 = vsel %vm521, %v520, %v519
      %v525 = vmul.f32 %v506, %v522
      %v526 = vmul.f32 %v507, %v520
      %v529 = vcombine.high %v525, %v525
      %530 = vrot.lane.b32.xlu0 %v525, 15
      %v531 = vpop.permute.xlu0 %530
      %532 = vrot.lane.b32.xlu0 %v529, 15
      %v533 = vpop.permute.xlu0 %532
      %534 = vrot.lane.b32.xlu0 %v526, 15
      %v535 = vpop.permute.xlu0 %534
      %vm536 = vcmask 121856
      %v537 = vsel %vm536, %v531, %v533
      %v538 = vsel %vm536, %v533, %v535
      %541 = vst [vmem:[#allocation3 + $0x10] sm:$0xf] %v537
      %542 = vst [vmem:[#allocation3 + $0x18] sm:$0xf] %v538
      %v543 = vld [vmem:[#allocation2] sm:$0xff]
      %v544 = vld [vmem:[#allocation2 + $0x8] sm:$0xf]
      %545 = vrot.lane.b32.xlu0 %v461, 127
      %v546 = vpop.permute.xlu0 %545
      %v547 = vrot.slane %v546, 4
      %vm548 = vcmask 1039360
      %v549 = vsel %vm548, %v547, %v546
      %v552 = vmul.f32 %v543, %v549
      %v553 = vmul.f32 %v544, %v547
      %v556 = vcombine.low %v552, %v552
      %v557 = vcombine.low %v553, %v553
      %558 = vrot.lane.b32.xlu0 %v556, 1
      %v559 = vpop.permute.xlu0 %558
      %560 = vrot.lane.b32.xlu0 %v552, 1
      %v561 = vpop.permute.xlu0 %560
      %562 = vrot.lane.b32.xlu0 %v557, 1
      %v563 = vpop.permute.xlu0 %562
      %vm564 = vcmask 7168
      %v565 = vsel %vm564, %v559, %v561
      %v566 = vsel %vm564, %v561, %v563
      %569 = vst [vmem:[#allocation3 + $0x10] sm:$0xf0] %v565
      %570 = vst [vmem:[#allocation3 + $0x18] sm:$0xf0] %v566
      %v571 = vld [vmem:[#allocation2 + $0x4] sm:$0xff]
      %v573 = vcombine.high %v571, %v571
      %575 = vst [vmem:[#allocation3 + $0x20] sm:$0xf] %v571
      %576 = vst [vmem:[#allocation3 + $0x28] sm:$0xf] %v573
      %v577 = vld [vmem:[#allocation2 + $0x4] sm:$0xff]
      %v578 = vld [vmem:[#allocation2 + $0xc] sm:$0xf]
      %579 = vrot.lane.b32.xlu0 %v517, 1
      %v580 = vpop.permute.xlu0 %579
      %v581 = vrot.slane %v580, 4
      %v582 = vsel %vm564, %v581, %v580
      %v585 = vmul.f32 %v577, %v582
      %v586 = vmul.f32 %v578, %v581
      %v589 = vcombine.low %v585, %v585
      %v590 = vcombine.low %v586, %v586
      %591 = vrot.lane.b32.xlu0 %v589, 127
      %v592 = vpop.permute.xlu0 %591
      %593 = vrot.lane.b32.xlu0 %v585, 127
      %v594 = vpop.permute.xlu0 %593
      %595 = vrot.lane.b32.xlu0 %v590, 127
      %v596 = vpop.permute.xlu0 %595
      %v597 = vsel %vm548, %v592, %v594
      %v598 = vsel %vm548, %v594, %v596
      %601 = vst [vmem:[#allocation3 + $0x20] sm:$0xf0] %v597
      %602 = vst [vmem:[#allocation3 + $0x28] sm:$0xf0] %v598
      %v603 = vld [vmem:[#allocation2 + $0x4] sm:$0xff]
      %v604 = vld [vmem:[#allocation2 + $0xc] sm:$0xf]
      %605 = vrot.lane.b32.xlu0 %v461, 15
      %v606 = vpop.permute.xlu0 %605
      %v607 = vrot.slane %v606, 4
      %v608 = vsel %vm536, %v607, %v606
      %v611 = vmul.f32 %v603, %v608
      %v612 = vmul.f32 %v604, %v607
      %v615 = vcombine.high %v611, %v611
      %616 = vrot.lane.b32.xlu0 %v611, 113
      %v617 = vpop.permute.xlu0 %616
      %618 = vrot.lane.b32.xlu0 %v615, 113
      %v619 = vpop.permute.xlu0 %618
      %620 = vrot.lane.b32.xlu0 %v612, 113
      %v621 = vpop.permute.xlu0 %620
      %v622 = vsel %vm521, %v617, %v619
      %v623 = vsel %vm521, %v619, %v621
      %626 = vst [vmem:[#allocation3 + $0x30] sm:$0xf] %v622
      %627 = vst [vmem:[#allocation3 + $0x38] sm:$0xf] %v623
      %v628 = vld [vmem:[#allocation2 + $0x4] sm:$0xff]
      %v629 = vld [vmem:[#allocation2 + $0xc] sm:$0xf]
      %v632 = vcombine.low %v628, %v628
      %v633 = vcombine.low %v629, %v629
      %634 = vrot.lane.b32.xlu0 %v632, 112
      %v635 = vpop.permute.xlu0 %634
      %636 = vrot.lane.b32.xlu0 %v628, 112
      %v637 = vpop.permute.xlu0 %636
      %638 = vrot.lane.b32.xlu0 %v633, 112
      %v639 = vpop.permute.xlu0 %638
      %vm640 = vcmask 916480
      %v641 = vsel %vm640, %v635, %v637
      %v642 = vsel %vm640, %v637, %v639
      %645 = vst [vmem:[#allocation3 + $0x30] sm:$0xf0] %v641
      %646 = vst [vmem:[#allocation3 + $0x38] sm:$0xf0] %v642
      %v647 = vld [vmem:[#allocation2 + $0x4] sm:$0xff]
      %v648 = vld [vmem:[#allocation2 + $0xc] sm:$0xf]
      %649 = vrot.lane.b32.xlu0 %v517, 17
      %v650 = vpop.permute.xlu0 %649
      %v651 = vrot.slane %v650, 4
      %v652 = vsel %vm480, %v651, %v650
      %v655 = vmul.f32 %v647, %v652
      %v656 = vmul.f32 %v648, %v651
      %v659 = vcombine.high %v655, %v655
      %660 = vrot.lane.b32.xlu0 %v655, 111
      %v661 = vpop.permute.xlu0 %660
      %662 = vrot.lane.b32.xlu0 %v659, 111
      %v663 = vpop.permute.xlu0 %662
      %664 = vrot.lane.b32.xlu0 %v656, 111
      %v665 = vpop.permute.xlu0 %664
      %v666 = vsel %vm465, %v661, %v663
      %v667 = vsel %vm465, %v663, %v665
      %670 = vst [vmem:[#allocation3 + $0x40] sm:$0xf] %v666
      %671 = vst [vmem:[#allocation3 + $0x48] sm:$0xf] %v667
      %v672 = vld [vmem:[%s3] sm:$0xf]
      %v673 = vld [vmem:[#allocation3] sm:$0xff]
      %v674 = vld [vmem:[#allocation3 + $0x8] sm:$0xff]
      %v675 = vld [vmem:[#allocation3 + $0x10] sm:$0xff]
      %v676 = vld [vmem:[#allocation3 + $0x18] sm:$0xff]
      %v677 = vld [vmem:[#allocation3 + $0x20] sm:$0xff]
      %v678 = vld [vmem:[#allocation3 + $0x28] sm:$0xff]
      %v679 = vld [vmem:[#allocation3 + $0x30] sm:$0xff]
      %v680 = vld [vmem:[#allocation3 + $0x38] sm:$0xff]
      %v681 = vld [vmem:[#allocation3 + $0x40] sm:$0xf]
      %v682 = vld [vmem:[#allocation3 + $0x48] sm:$0xf]
      %v683 = vld [vmem:[%s4] sm:$0xf]
      %685 = vset.pattern.permute.xlu0 0
      %686 = vperm.xlu0 %685, %v683
      %v687 = vpop.permute.xlu0 %686
      %vm689 = vcmask 293888
      %v691 = vsel %vm689, %v672, 0
      %vm693 = vcmask 1043456
      %v695 = vsel %vm693, %v681, 0
      %v698 = vsel %vm693, %v682, 0
      %700 = vmatprep.subr.mxu0 0.0
      %701 = vmatpush1.msra.mxu0 0.0
      %702 = vmatprep.subr.mxu0 0.0
      %703 = vmatpush1.msra.mxu0 0.0
      %704 = vmatprep.subr.mxu0 0.0
      %705 = vmatpush1.msra.mxu0 0.0
      %706 = vmatprep.subr.mxu0 0.0
      %707 = vmatpush1.msra.mxu0 0.0
      %708 = vmatprep.subr.mxu0 0.0
      %709 = vmatpush1.msra.mxu0 0.0
      %710 = vmatprep.subr.mxu0 0.0
      %711 = vmatpush1.msra.mxu0 0.0
      %712 = vmatprep.subr.mxu0 0.0
      %713 = vmatpush1.msra.mxu0 0.0
      %714 = vmatprep.subr.mxu0 0.0
      %715 = vmatpush1.msra.mxu0 0.0
      %716 = vmatprep.subr.mxu0 0.0
      %717 = vmatpush1.msra.mxu0 0.0
      %718 = vmatprep.subr.mxu0 0.0
      %719 = vmatpush1.msra.mxu0 0.0
      %720 = vmatprep.subr.mxu0 0.0
      %721 = vmatpush1.msra.mxu0 0.0
      %722 = vmatprep.subr.mxu0 %v698
      %723 = vmatpush1.msra.mxu0 %v695
      %724 = vmatprep.subr.mxu0 %v680
      %725 = vmatpush1.msra.mxu0 %v679
      %726 = vmatprep.subr.mxu0 %v678
      %727 = vmatpush1.msra.mxu0 %v677
      %728 = vmatprep.subr.mxu0 %v676
      %729 = vmatpush1.msra.mxu0 %v675
      %730 = vmatprep.subr.mxu0 %v674
      %731 = vmatpush1.msra.mxu0 %v673
      %732 = vmatprep.subr.mxu0 0.0
      %733 = vmatpush2.msra.mxu0 0.0
      %734 = vmatprep.subr.mxu0 0.0
      %735 = vmatpush2.msra.mxu0 0.0
      %736 = vmatprep.subr.mxu0 0.0
      %737 = vmatpush2.msra.mxu0 0.0
      %738 = vmatprep.subr.mxu0 0.0
      %739 = vmatpush2.msra.mxu0 0.0
      %740 = vmatprep.subr.mxu0 0.0
      %741 = vmatpush2.msra.mxu0 0.0
      %742 = vmatprep.subr.mxu0 0.0
      %743 = vmatpush2.msra.mxu0 0.0
      %744 = vmatprep.subr.mxu0 0.0
      %745 = vmatpush2.msra.mxu0 0.0
      %746 = vmatprep.subr.mxu0 0.0
      %747 = vmatpush2.msra.mxu0 0.0
      %748 = vmatprep.subr.mxu0 0.0
      %749 = vmatpush2.msra.mxu0 0.0
      %750 = vmatprep.subr.mxu0 0.0
      %751 = vmatpush2.msra.mxu0 0.0
      %752 = vmatprep.subr.mxu0 0.0
      %753 = vmatpush2.msra.mxu0 0.0
      %754 = vmatprep.subr.mxu0 0.0
      %755 = vmatpush2.msra.mxu0 0.0
      %756 = vmatprep.subr.mxu0 0.0
      %757 = vmatpush2.msra.mxu0 0.0
      %758 = vmatprep.subr.mxu0 0.0
      %759 = vmatpush2.msra.mxu0 0.0
      %760 = vmatprep.subr.mxu0 0.0
      %761 = vmatpush2.msra.mxu0 0.0
      %762 = vmatprep.subr.mxu0 0.0
      %763 = vmatpush2.msra.mxu0 0.0
      %764 = vmatprep.mubr.f32.mxu0 0.0
      %765 = vmatmul.mubr.f32.gmra.mxu0 %v691
      %v766 = vpop.f32.mrf.mxu0
      %v767 = vadd.f32 %v687, %v766
      %v768 = vpop.f32.mrf.mxu0
      %v769 = vadd.f32 %v687, %v768
      %770 = vdwg.mxu0
      %v771 = vsel %vm693, %v767, 0.0
      %v772 = vsel %vm693, %v769, 0.0
      %v773 = vadd.f32 %v771, %v772
      %774 = vadd.xlane.f32.xlu0 %v773
      %v775 = vpop.xlane.xlu0 %774
      %v776 = vmul.f32 %v775, 0.00390625
      %v777 = vsel %vm693, %v767, -inf
      %v778 = vsel %vm693, %v769, -inf
      %v779 = vmax.f32 %v777, %v778
      %780 = vmax.xlane.f32.xlu0 %v779
      %v781 = vpop.xlane.xlu0 %780
      %v782 = vld [vmem:[%s1] sm:$0x1]
      %v784 = vlaneseq
      %v785 = vshrl.u32 %v784, 7
      %v786 = vsub.s32 0, %v785
      %v787 = vrot.slane %v782, %v786
      %v789 = vmul.f32 %v776, %v787
      %v790 = vsub.f32 1.0, %v782
      %v792 = vlaneseq
      %v793 = vshrl.u32 %v792, 7
      %v794 = vsub.s32 0, %v793
      %v795 = vrot.slane %v790, %v794
      %v797 = vmul.f32 %v781, %v795
      %v798 = vadd.f32 %v789, %v797
      %v799 = vld [vmem:[%s5] sm:$0xf]
      %v800 = vld [vmem:[%s6] sm:$0xf]
      %802 = vset.pattern.permute.xlu0 0
      %803 = vperm.xlu0 %802, %v800
      %v804 = vpop.permute.xlu0 %803
      %vm806 = vcmask 31744
      %v808 = vsel %vm806, %v799, 0
      %v811 = vsel %vm693, %v798, 0
      %813 = vmatprep.subr.mxu0 0.0
      %814 = vmatpush1.msra.mxu0 0.0
      %815 = vmatprep.subr.mxu0 0.0
      %816 = vmatpush1.msra.mxu0 0.0
      %817 = vmatprep.subr.mxu0 0.0
      %818 = vmatpush1.msra.mxu0 0.0
      %819 = vmatprep.subr.mxu0 0.0
      %820 = vmatpush1.msra.mxu0 0.0
      %821 = vmatprep.subr.mxu0 0.0
      %822 = vmatpush1.msra.mxu0 0.0
      %823 = vmatprep.subr.mxu0 0.0
      %824 = vmatpush1.msra.mxu0 0.0
      %825 = vmatprep.subr.mxu0 0.0
      %826 = vmatpush1.msra.mxu0 0.0
      %827 = vmatprep.subr.mxu0 0.0
      %828 = vmatpush1.msra.mxu0 0.0
      %829 = vmatprep.subr.mxu0 0.0
      %830 = vmatpush1.msra.mxu0 0.0
      %831 = vmatprep.subr.mxu0 0.0
      %832 = vmatpush1.msra.mxu0 0.0
      %833 = vmatprep.subr.mxu0 0.0
      %834 = vmatpush1.msra.mxu0 0.0
      %835 = vmatprep.subr.mxu0 0.0
      %836 = vmatpush1.msra.mxu0 0.0
      %837 = vmatprep.subr.mxu0 0.0
      %838 = vmatpush1.msra.mxu0 0.0
      %839 = vmatprep.subr.mxu0 0.0
      %840 = vmatpush1.msra.mxu0 0.0
      %841 = vmatprep.subr.mxu0 0.0
      %842 = vmatpush1.msra.mxu0 0.0
      %843 = vmatprep.subr.mxu0 0.0
      %844 = vmatpush1.msra.mxu0 %v811
      %845 = vmatprep.subr.mxu0 0.0
      %846 = vmatpush2.msra.mxu0 0.0
      %847 = vmatprep.subr.mxu0 0.0
      %848 = vmatpush2.msra.mxu0 0.0
      %849 = vmatprep.subr.mxu0 0.0
      %850 = vmatpush2.msra.mxu0 0.0
      %851 = vmatprep.subr.mxu0 0.0
      %852 = vmatpush2.msra.mxu0 0.0
      %853 = vmatprep.subr.mxu0 0.0
      %854 = vmatpush2.msra.mxu0 0.0
      %855 = vmatprep.subr.mxu0 0.0
      %856 = vmatpush2.msra.mxu0 0.0
      %857 = vmatprep.subr.mxu0 0.0
      %858 = vmatpush2.msra.mxu0 0.0
      %859 = vmatprep.subr.mxu0 0.0
      %860 = vmatpush2.msra.mxu0 0.0
      %861 = vmatprep.subr.mxu0 0.0
      %862 = vmatpush2.msra.mxu0 0.0
      %863 = vmatprep.subr.mxu0 0.0
      %864 = vmatpush2.msra.mxu0 0.0
      %865 = vmatprep.subr.mxu0 0.0
      %866 = vmatpush2.msra.mxu0 0.0
      %867 = vmatprep.subr.mxu0 0.0
      %868 = vmatpush2.msra.mxu0 0.0
      %869 = vmatprep.subr.mxu0 0.0
      %870 = vmatpush2.msra.mxu0 0.0
      %871 = vmatprep.subr.mxu0 0.0
      %872 = vmatpush2.msra.mxu0 0.0
      %873 = vmatprep.subr.mxu0 0.0
      %874 = vmatpush2.msra.mxu0 0.0
      %875 = vmatprep.subr.mxu0 0.0
      %876 = vmatpush2.msra.mxu0 0.0
      %877 = vmatprep.mubr.f32.mxu0 0.0
      %878 = vmatmul.mubr.f32.gmra.mxu0 %v808
      %v879 = vpop.f32.mrf.mxu0
      %v880 = vadd.f32 %v804, %v879
      %v881 = vpop.f32.mrf.mxu0
      %882 = vdwg.mxu0
      %v883 = vmax.f32 %v880, 0.0
      %v884 = vld [vmem:[%s7] sm:$0xf]
      %v885 = vld [vmem:[%s8] sm:$0xf]
      %887 = vset.pattern.permute.xlu0 0
      %888 = vperm.xlu0 %887, %v885
      %v889 = vpop.permute.xlu0 %888
      %v892 = vsel %vm806, %v884, 0
      %v895 = vsel %vm693, %v883, 0
      %897 = vmatprep.subr.mxu0 0.0
      %898 = vmatpush1.msra.mxu0 0.0
      %899 = vmatprep.subr.mxu0 0.0
      %900 = vmatpush1.msra.mxu0 0.0
      %901 = vmatprep.subr.mxu0 0.0
      %902 = vmatpush1.msra.mxu0 0.0
      %903 = vmatprep.subr.mxu0 0.0
      %904 = vmatpush1.msra.mxu0 0.0
      %905 = vmatprep.subr.mxu0 0.0
      %906 = vmatpush1.msra.mxu0 0.0
      %907 = vmatprep.subr.mxu0 0.0
      %908 = vmatpush1.msra.mxu0 0.0
      %909 = vmatprep.subr.mxu0 0.0
      %910 = vmatpush1.msra.mxu0 0.0
      %911 = vmatprep.subr.mxu0 0.0
      %912 = vmatpush1.msra.mxu0 0.0
      %913 = vmatprep.subr.mxu0 0.0
      %914 = vmatpush1.msra.mxu0 0.0
      %915 = vmatprep.subr.mxu0 0.0
      %916 = vmatpush1.msra.mxu0 0.0
      %917 = vmatprep.subr.mxu0 0.0
      %918 = vmatpush1.msra.mxu0 0.0
      %919 = vmatprep.subr.mxu0 0.0
      %920 = vmatpush1.msra.mxu0 0.0
      %921 = vmatprep.subr.mxu0 0.0
      %922 = vmatpush1.msra.mxu0 0.0
      %923 = vmatprep.subr.mxu0 0.0
      %924 = vmatpush1.msra.mxu0 0.0
      %925 = vmatprep.subr.mxu0 0.0
      %926 = vmatpush1.msra.mxu0 0.0
      %927 = vmatprep.subr.mxu0 0.0
      %928 = vmatpush1.msra.mxu0 %v895
      %929 = vmatprep.subr.mxu0 0.0
      %930 = vmatpush2.msra.mxu0 0.0
      %931 = vmatprep.subr.mxu0 0.0
      %932 = vmatpush2.msra.mxu0 0.0
      %933 = vmatprep.subr.mxu0 0.0
      %934 = vmatpush2.msra.mxu0 0.0
      %935 = vmatprep.subr.mxu0 0.0
      %936 = vmatpush2.msra.mxu0 0.0
      %937 = vmatprep.subr.mxu0 0.0
      %938 = vmatpush2.msra.mxu0 0.0
      %939 = vmatprep.subr.mxu0 0.0
      %940 = vmatpush2.msra.mxu0 0.0
      %941 = vmatprep.subr.mxu0 0.0
      %942 = vmatpush2.msra.mxu0 0.0
      %943 = vmatprep.subr.mxu0 0.0
      %944 = vmatpush2.msra.mxu0 0.0
      %945 = vmatprep.subr.mxu0 0.0
      %946 = vmatpush2.msra.mxu0 0.0
      %947 = vmatprep.subr.mxu0 0.0
      %948 = vmatpush2.msra.mxu0 0.0
      %949 = vmatprep.subr.mxu0 0.0
      %950 = vmatpush2.msra.mxu0 0.0
      %951 = vmatprep.subr.mxu0 0.0
      %952 = vmatpush2.msra.mxu0 0.0
      %953 = vmatprep.subr.mxu0 0.0
      %954 = vmatpush2.msra.mxu0 0.0
      %955 = vmatprep.subr.mxu0 0.0
      %956 = vmatpush2.msra.mxu0 0.0
      %957 = vmatprep.subr.mxu0 0.0
      %958 = vmatpush2.msra.mxu0 0.0
      %959 = vmatprep.subr.mxu0 0.0
      %960 = vmatpush2.msra.mxu0 0.0
      %961 = vmatprep.mubr.f32.mxu0 0.0
      %962 = vmatmul.mubr.f32.gmra.mxu0 %v892
      %v963 = vpop.f32.mrf.mxu0
      %v964 = vadd.f32 %v889, %v963
      %v965 = vpop.f32.mrf.mxu0
      %966 = vdwg.mxu0
      %vm967 = vcmask 11264
      %v968 = vsel %vm967, %v964, 0.0
      %969 = vadd.xlane.f32.xlu0 %v968
      %v970 = vpop.xlane.xlu0 %969
      %v971 = vsub.f32 0.0, %v970
      %v972 = vmul.f32 %v971, 1.442695
      %v973 = vpow.pop %v972
      %v974 = vadd.f32 %v973, 1.0
      %v975 = vrcp.pop %v974
      %v976 = vmul.f32 1.0, %v975
      %v977 = vmul.f32 %v767, %v976
      %v978 = vmul.f32 %v769, %v976
      %979 = vst [vmem:[#allocation4] sm:$0x3] 0.0
      %980 = vst [vmem:[#allocation4 + $0x6] sm:$0x3] 0.0
      %v981 = vsel %vm693, %v977, 0.0
      %v982 = vrot.slane %v981, 4
      %v983 = vadd.f32 %v981, %v982
      %v984 = vrot.slane %v983, 2
      %v985 = vadd.f32 %v983, %v984
      %v986 = vrot.slane %v985, 1
      %v987 = vadd.f32 %v985, %v986
      %v988 = vsel %vm693, %v978, 0.0
      %v989 = vrot.slane %v988, 4
      %v990 = vadd.f32 %v988, %v989
      %v991 = vrot.slane %v990, 2
      %v992 = vadd.f32 %v990, %v991
      %v993 = vrot.slane %v992, 1
      %v994 = vadd.f32 %v992, %v993
      %v995 = vrcp.pop 4.0
      %v996 = vmul.f32 %v987, %v995
      %v997 = vmul.f32 %v994, %v995
      %v1000 = vcombine.low %v996, %v997
      %v1002 = vunpack.c.l.s4 1966171168
      %v1003 = vunpack.c.0.s8 %v1002
      %v1004 = vlaneseq
      %v1005 = vshrl.u32 %v1004, 7
      %v1006 = vsub.s32 %v1003, %v1005
      %v1007 = vrot.slane %v1000, %v1006
      %v1009 = vunpack.c.l.s4 1966171168
      %v1010 = vunpack.c.0.s8 %v1009
      %v1011 = vlaneseq
      %v1012 = vshrl.u32 %v1011, 7
      %v1013 = vsub.s32 %v1010, %v1012
      %v1014 = vrot.slane %v1007, %v1013
      %v1016 = vlaneseq
      %vm1017 = vcmp.ge.s32.totalorder %v1016, 0
      %vm1018 = vcmp.lt.s32.totalorder %v1016, 256
      %vm1019 = vmand %vm1017, %vm1018
      %s1020 = scalar_lea.vmem [#allocation4], 2
      %1021 = vst.msk [vmem:[%s1020] ss:$2 sm:$0x3] %vm1019, %v1014
      %v1022 = vsel %vm693, %v977, -inf
      %v1023 = vrot.slane %v1022, 4
      %v1024 = vmax.f32 %v1022, %v1023
      %v1025 = vrot.slane %v1024, 2
      %v1026 = vmax.f32 %v1024, %v1025
      %v1027 = vrot.slane %v1026, 1
      %v1028 = vmax.f32 %v1026, %v1027
      %v1029 = vsel %vm693, %v978, -inf
      %v1030 = vrot.slane %v1029, 4
      %v1031 = vmax.f32 %v1029, %v1030
      %v1032 = vrot.slane %v1031, 2
      %v1033 = vmax.f32 %v1031, %v1032
      %v1034 = vrot.slane %v1033, 1
      %v1035 = vmax.f32 %v1033, %v1034
      %v1038 = vcombine.low %v1028, %v1035
      %v1040 = vunpack.c.l.s4 1966171168
      %v1041 = vunpack.c.0.s8 %v1040
      %v1042 = vlaneseq
      %v1043 = vshrl.u32 %v1042, 7
      %v1044 = vsub.s32 %v1041, %v1043
      %v1045 = vrot.slane %v1038, %v1044
      %v1047 = vunpack.c.l.s4 1966171168
      %v1048 = vunpack.c.0.s8 %v1047
      %v1049 = vlaneseq
      %v1050 = vshrl.u32 %v1049, 7
      %v1051 = vsub.s32 %v1048, %v1050
      %v1052 = vrot.slane %v1045, %v1051
      %s1054 = scalar_lea.vmem [#allocation4], 3
      %1055 = vst.msk [vmem:[%s1054] ss:$2 sm:$0x3] %vm1019, %v1052
      %v1056 = vld [vmem:[#allocation4] sm:$0x3f]
      %v1058 = vunpack.c.l.s4 1983009808
      %v1059 = vunpack.c.0.s8 %v1058
      %v1060 = vlaneseq
      %v1061 = vshrl.u32 %v1060, 7
      %v1062 = vsub.s32 %v1059, %v1061
      %v1063 = vrot.slane %v461, %v1062
      %1064 = vrot.lane.b32.xlu0 %v1063, 111
      %v1065 = vpop.permute.xlu0 %1064
      %v1066 = vrot.slane %v1065, 6
      %v1067 = vsel %vm465, %v1066, %v1065
      %v1069 = vmul.f32 %v1056, %v1067
      %v1071 = vcombine.high %v1069, %v1069
      %v1073 = vunpack.c.l.s4 1983009808
      %v1074 = vunpack.c.0.s8 %v1073
      %v1075 = vlaneseq
      %v1076 = vshrl.u32 %v1075, 7
      %v1077 = vsub.s32 %v1074, %v1076
      %v1078 = vrot.slane %v1069, %v1077
      %v1080 = vunpack.c.l.s4 1983009808
      %v1081 = vunpack.c.0.s8 %v1080
      %v1082 = vlaneseq
      %v1083 = vshrl.u32 %v1082, 7
      %v1084 = vsub.s32 %v1081, %v1083
      %v1085 = vrot.slane %v1071, %v1084
      %v1086 = vcombine.high %v1078, %v1078
      %1087 = vrot.lane.b32.xlu0 %v1078, 17
      %v1088 = vpop.permute.xlu0 %1087
      %1089 = vrot.lane.b32.xlu0 %v1086, 17
      %v1090 = vpop.permute.xlu0 %1089
      %1091 = vrot.lane.b32.xlu0 %v1085, 17
      %v1092 = vpop.permute.xlu0 %1091
      %v1093 = vsel %vm480, %v1088, %v1090
      %v1094 = vsel %vm480, %v1090, %v1092
      %1097 = vst [vmem:[#allocation5] sm:$0x3] %v1093
      %1098 = vst [vmem:[#allocation5 + $0x8] sm:$0x3] %v1094
      %v1099 = vld [vmem:[#allocation4] sm:$0x3f]
      %v1101 = vcombine.low %v1099, %v1099
      %v1103 = vunpack.c.l.s4 1983009808
      %v1104 = vunpack.c.0.s8 %v1103
      %v1105 = vlaneseq
      %v1106 = vshrl.u32 %v1105, 7
      %v1107 = vsub.s32 %v1104, %v1106
      %v1108 = vrot.slane %v1101, %v1107
      %v1110 = vunpack.c.l.s4 1983009808
      %v1111 = vunpack.c.0.s8 %v1110
      %v1112 = vlaneseq
      %v1113 = vshrl.u32 %v1112, 7
      %v1114 = vsub.s32 %v1111, %v1113
      %v1115 = vrot.slane %v1099, %v1114
      %v1116 = vcombine.high %v1108, %v1108
      %1117 = vrot.lane.b32.xlu0 %v1108, 16
      %v1118 = vpop.permute.xlu0 %1117
      %1119 = vrot.lane.b32.xlu0 %v1116, 16
      %v1120 = vpop.permute.xlu0 %1119
      %1121 = vrot.lane.b32.xlu0 %v1115, 16
      %v1122 = vpop.permute.xlu0 %1121
      %v1123 = vsel %vm499, %v1118, %v1120
      %v1124 = vsel %vm499, %v1120, %v1122
      %1127 = vst [vmem:[#allocation5] sm:$0xc] %v1123
      %1128 = vst [vmem:[#allocation5 + $0x8] sm:$0xc] %v1124
      %v1129 = vld [vmem:[#allocation4] sm:$0x3f]
      %v1131 = vunpack.c.l.s4 1983009808
      %v1132 = vunpack.c.0.s8 %v1131
      %v1133 = vlaneseq
      %v1134 = vshrl.u32 %v1133, 7
      %v1135 = vsub.s32 %v1132, %v1134
      %v1136 = vrot.slane %v517, %v1135
      %1137 = vrot.lane.b32.xlu0 %v1136, 113
      %v1138 = vpop.permute.xlu0 %1137
      %v1139 = vrot.slane %v1138, 6
      %v1140 = vsel %vm521, %v1139, %v1138
      %v1142 = vmul.f32 %v1129, %v1140
      %v1144 = vcombine.high %v1142, %v1142
      %v1146 = vunpack.c.l.s4 1983009808
      %v1147 = vunpack.c.0.s8 %v1146
      %v1148 = vlaneseq
      %v1149 = vshrl.u32 %v1148, 7
      %v1150 = vsub.s32 %v1147, %v1149
      %v1151 = vrot.slane %v1142, %v1150
      %v1153 = vunpack.c.l.s4 1983009808
      %v1154 = vunpack.c.0.s8 %v1153
      %v1155 = vlaneseq
      %v1156 = vshrl.u32 %v1155, 7
      %v1157 = vsub.s32 %v1154, %v1156
      %v1158 = vrot.slane %v1144, %v1157
      %v1159 = vcombine.low %v1151, %v1151
      %v1160 = vcombine.low %v1158, %v1158
      %1161 = vrot.lane.b32.xlu0 %v1159, 15
      %v1162 = vpop.permute.xlu0 %1161
      %1163 = vrot.lane.b32.xlu0 %v1151, 15
      %v1164 = vpop.permute.xlu0 %1163
      %1165 = vrot.lane.b32.xlu0 %v1160, 15
      %v1166 = vpop.permute.xlu0 %1165
      %v1167 = vsel %vm536, %v1162, %v1164
      %v1168 = vsel %vm536, %v1164, %v1166
      %1171 = vst [vmem:[#allocation5] sm:$0x30] %v1167
      %1172 = vst [vmem:[#allocation5 + $0x8] sm:$0x30] %v1168
      %v1173 = vld [vmem:[#allocation4] sm:$0x3f]
      %1174 = vrot.lane.b32.xlu0 %v1063, 127
      %v1175 = vpop.permute.xlu0 %1174
      %v1176 = vrot.slane %v1175, 6
      %v1177 = vsel %vm548, %v1176, %v1175
      %v1179 = vmul.f32 %v1173, %v1177
      %v1181 = vcombine.low %v1179, %v1179
      %v1183 = vunpack.c.l.s4 1983009808
      %v1184 = vunpack.c.0.s8 %v1183
      %v1185 = vlaneseq
      %v1186 = vshrl.u32 %v1185, 7
      %v1187 = vsub.s32 %v1184, %v1186
      %v1188 = vrot.slane %v1181, %v1187
      %v1190 = vunpack.c.l.s4 1983009808
      %v1191 = vunpack.c.0.s8 %v1190
      %v1192 = vlaneseq
      %v1193 = vshrl.u32 %v1192, 7
      %v1194 = vsub.s32 %v1191, %v1193
      %v1195 = vrot.slane %v1179, %v1194
      %v1196 = vcombine.low %v1188, %v1188
      %v1197 = vcombine.low %v1195, %v1195
      %1198 = vrot.lane.b32.xlu0 %v1196, 1
      %v1199 = vpop.permute.xlu0 %1198
      %1200 = vrot.lane.b32.xlu0 %v1188, 1
      %v1201 = vpop.permute.xlu0 %1200
      %1202 = vrot.lane.b32.xlu0 %v1197, 1
      %v1203 = vpop.permute.xlu0 %1202
      %v1204 = vsel %vm564, %v1199, %v1201
      %v1205 = vsel %vm564, %v1201, %v1203
      %1208 = vst [vmem:[#allocation5] sm:$0xc0] %v1204
      %1209 = vst [vmem:[#allocation5 + $0x8] sm:$0xc0] %v1205
      %v1210 = vld [vmem:[#allocation4 + $0x2] sm:$0xf]
      %v1213 = vunpack.c.l.s4 1983009808
      %v1214 = vunpack.c.0.s8 %v1213
      %v1215 = vlaneseq
      %v1216 = vshrl.u32 %v1215, 7
      %v1217 = vsub.s32 %v1214, %v1216
      %v1218 = vrot.slane %v1210, %v1217
      %v1219 = vcombine.high %v1218, %v1218
      %1222 = vst [vmem:[#allocation5 + $0x10] sm:$0x3] %v1218
      %1223 = vst [vmem:[#allocation5 + $0x18] sm:$0x3] %v1219
      %v1224 = vld [vmem:[#allocation4 + $0x2] sm:$0x3f]
      %1225 = vrot.lane.b32.xlu0 %v1136, 1
      %v1226 = vpop.permute.xlu0 %1225
      %v1227 = vrot.slane %v1226, 6
      %v1228 = vsel %vm564, %v1227, %v1226
      %v1230 = vmul.f32 %v1224, %v1228
      %v1232 = vcombine.low %v1230, %v1230
      %v1234 = vunpack.c.l.s4 1983009808
      %v1235 = vunpack.c.0.s8 %v1234
      %v1236 = vlaneseq
      %v1237 = vshrl.u32 %v1236, 7
      %v1238 = vsub.s32 %v1235, %v1237
      %v1239 = vrot.slane %v1232, %v1238
      %v1241 = vunpack.c.l.s4 1983009808
      %v1242 = vunpack.c.0.s8 %v1241
      %v1243 = vlaneseq
      %v1244 = vshrl.u32 %v1243, 7
      %v1245 = vsub.s32 %v1242, %v1244
      %v1246 = vrot.slane %v1230, %v1245
      %v1247 = vcombine.high %v1239, %v1239
      %1248 = vrot.lane.b32.xlu0 %v1239, 127
      %v1249 = vpop.permute.xlu0 %1248
      %1250 = vrot.lane.b32.xlu0 %v1247, 127
      %v1251 = vpop.permute.xlu0 %1250
      %1252 = vrot.lane.b32.xlu0 %v1246, 127
      %v1253 = vpop.permute.xlu0 %1252
      %v1254 = vsel %vm548, %v1249, %v1251
      %v1255 = vsel %vm548, %v1251, %v1253
      %1258 = vst [vmem:[#allocation5 + $0x10] sm:$0xc] %v1254
      %1259 = vst [vmem:[#allocation5 + $0x18] sm:$0xc] %v1255
      %v1260 = vld [vmem:[#allocation4 + $0x2] sm:$0x3f]
      %1261 = vrot.lane.b32.xlu0 %v1063, 15
      %v1262 = vpop.permute.xlu0 %1261
      %v1263 = vrot.slane %v1262, 6
      %v1264 = vsel %vm536, %v1263, %v1262
      %v1266 = vmul.f32 %v1260, %v1264
      %v1268 = vcombine.high %v1266, %v1266
      %v1270 = vunpack.c.l.s4 1983009808
      %v1271 = vunpack.c.0.s8 %v1270
      %v1272 = vlaneseq
      %v1273 = vshrl.u32 %v1272, 7
      %v1274 = vsub.s32 %v1271, %v1273
      %v1275 = vrot.slane %v1266, %v1274
      %v1277 = vunpack.c.l.s4 1983009808
      %v1278 = vunpack.c.0.s8 %v1277
      %v1279 = vlaneseq
      %v1280 = vshrl.u32 %v1279, 7
      %v1281 = vsub.s32 %v1278, %v1280
      %v1282 = vrot.slane %v1268, %v1281
      %v1283 = vcombine.low %v1275, %v1275
      %v1284 = vcombine.low %v1282, %v1282
      %1285 = vrot.lane.b32.xlu0 %v1283, 113
      %v1286 = vpop.permute.xlu0 %1285
      %1287 = vrot.lane.b32.xlu0 %v1275, 113
      %v1288 = vpop.permute.xlu0 %1287
      %1289 = vrot.lane.b32.xlu0 %v1284, 113
      %v1290 = vpop.permute.xlu0 %1289
      %v1291 = vsel %vm521, %v1286, %v1288
      %v1292 = vsel %vm521, %v1288, %v1290
      %1295 = vst [vmem:[#allocation5 + $0x10] sm:$0x30] %v1291
      %1296 = vst [vmem:[#allocation5 + $0x18] sm:$0x30] %v1292
      %v1297 = vld [vmem:[#allocation4 + $0x2] sm:$0x3f]
      %v1299 = vcombine.low %v1297, %v1297
      %v1301 = vunpack.c.l.s4 1983009808
      %v1302 = vunpack.c.0.s8 %v1301
      %v1303 = vlaneseq
      %v1304 = vshrl.u32 %v1303, 7
      %v1305 = vsub.s32 %v1302, %v1304
      %v1306 = vrot.slane %v1299, %v1305
      %v1308 = vunpack.c.l.s4 1983009808
      %v1309 = vunpack.c.0.s8 %v1308
      %v1310 = vlaneseq
      %v1311 = vshrl.u32 %v1310, 7
      %v1312 = vsub.s32 %v1309, %v1311
      %v1313 = vrot.slane %v1297, %v1312
      %v1314 = vcombine.low %v1306, %v1306
      %v1315 = vcombine.low %v1313, %v1313
      %1316 = vrot.lane.b32.xlu0 %v1314, 112
      %v1317 = vpop.permute.xlu0 %1316
      %1318 = vrot.lane.b32.xlu0 %v1306, 112
      %v1319 = vpop.permute.xlu0 %1318
      %1320 = vrot.lane.b32.xlu0 %v1315, 112
      %v1321 = vpop.permute.xlu0 %1320
      %v1322 = vsel %vm640, %v1317, %v1319
      %v1323 = vsel %vm640, %v1319, %v1321
      %1326 = vst [vmem:[#allocation5 + $0x10] sm:$0xc0] %v1322
      %1327 = vst [vmem:[#allocation5 + $0x18] sm:$0xc0] %v1323
      %v1328 = vld [vmem:[#allocation4 + $0x2] sm:$0x3f]
      %1329 = vrot.lane.b32.xlu0 %v1136, 17
      %v1330 = vpop.permute.xlu0 %1329
      %v1331 = vrot.slane %v1330, 6
      %v1332 = vsel %vm480, %v1331, %v1330
      %v1334 = vmul.f32 %v1328, %v1332
      %v1336 = vcombine.high %v1334, %v1334
      %v1338 = vunpack.c.l.s4 1983009808
      %v1339 = vunpack.c.0.s8 %v1338
      %v1340 = vlaneseq
      %v1341 = vshrl.u32 %v1340, 7
      %v1342 = vsub.s32 %v1339, %v1341
      %v1343 = vrot.slane %v1334, %v1342
      %v1345 = vunpack.c.l.s4 1983009808
      %v1346 = vunpack.c.0.s8 %v1345
      %v1347 = vlaneseq
      %v1348 = vshrl.u32 %v1347, 7
      %v1349 = vsub.s32 %v1346, %v1348
      %v1350 = vrot.slane %v1336, %v1349
      %v1351 = vcombine.high %v1343, %v1343
      %1352 = vrot.lane.b32.xlu0 %v1343, 111
      %v1353 = vpop.permute.xlu0 %1352
      %1354 = vrot.lane.b32.xlu0 %v1351, 111
      %v1355 = vpop.permute.xlu0 %1354
      %1356 = vrot.lane.b32.xlu0 %v1350, 111
      %v1357 = vpop.permute.xlu0 %1356
      %v1358 = vsel %vm465, %v1353, %v1355
      %v1359 = vsel %vm465, %v1355, %v1357
      %1362 = vst [vmem:[#allocation5 + $0x20] sm:$0x3] %v1358
      %1363 = vst [vmem:[#allocation5 + $0x28] sm:$0x3] %v1359
      %v1364 = vld [vmem:[%s9] sm:$0xff]
      %v1365 = vld [vmem:[%s9 + $0x8] sm:$0xff]
      %v1366 = vld [vmem:[#allocation5] sm:$0xff]
      %v1367 = vld [vmem:[#allocation5 + $0x8] sm:$0xff]
      %v1368 = vld [vmem:[#allocation5 + $0x10] sm:$0xff]
      %v1369 = vld [vmem:[#allocation5 + $0x18] sm:$0xff]
      %v1370 = vld [vmem:[#allocation5 + $0x20] sm:$0x3]
      %v1371 = vld [vmem:[#allocation5 + $0x28] sm:$0x3]
      %v1372 = vld [vmem:[%s10] sm:$0xff]
      %v1373 = vld [vmem:[%s10 + $0x8] sm:$0xff]
      %1375 = vset.pattern.permute.xlu0 0
      %1376 = vperm.xlu0 %1375, %v1372
      %v1377 = vpop.permute.xlu0 %1376
      %1380 = vset.pattern.permute.xlu0 0
      %1381 = vperm.xlu0 %1380, %v1373
      %v1382 = vpop.permute.xlu0 %1381
      %vm1384 = vcmask 146432
      %v1386 = vsel %vm1384, %v1364, 0
      %v1389 = vsel %vm1384, %v1365, 0
      %vm1391 = vcmask 1041408
      %v1393 = vsel %vm1391, %v1370, 0
      %v1396 = vsel %vm1391, %v1371, 0
      %1398 = vmatprep.subr.mxu0 0.0
      %1399 = vmatpush1.msra.mxu0 0.0
      %1400 = vmatprep.subr.mxu0 0.0
      %1401 = vmatpush1.msra.mxu0 0.0
      %1402 = vmatprep.subr.mxu0 0.0
      %1403 = vmatpush1.msra.mxu0 0.0
      %1404 = vmatprep.subr.mxu0 0.0
      %1405 = vmatpush1.msra.mxu0 0.0
      %1406 = vmatprep.subr.mxu0 0.0
      %1407 = vmatpush1.msra.mxu0 0.0
      %1408 = vmatprep.subr.mxu0 0.0
      %1409 = vmatpush1.msra.mxu0 0.0
      %1410 = vmatprep.subr.mxu0 0.0
      %1411 = vmatpush1.msra.mxu0 0.0
      %1412 = vmatprep.subr.mxu0 0.0
      %1413 = vmatpush1.msra.mxu0 0.0
      %1414 = vmatprep.subr.mxu0 0.0
      %1415 = vmatpush1.msra.mxu0 0.0
      %1416 = vmatprep.subr.mxu0 0.0
      %1417 = vmatpush1.msra.mxu0 0.0
      %1418 = vmatprep.subr.mxu0 0.0
      %1419 = vmatpush1.msra.mxu0 0.0
      %1420 = vmatprep.subr.mxu0 0.0
      %1421 = vmatpush1.msra.mxu0 0.0
      %1422 = vmatprep.subr.mxu0 0.0
      %1423 = vmatpush1.msra.mxu0 0.0
      %1424 = vmatprep.subr.mxu0 %v1396
      %1425 = vmatpush1.msra.mxu0 %v1393
      %1426 = vmatprep.subr.mxu0 %v1369
      %1427 = vmatpush1.msra.mxu0 %v1368
      %1428 = vmatprep.subr.mxu0 %v1367
      %1429 = vmatpush1.msra.mxu0 %v1366
      %1430 = vmatprep.subr.mxu0 0.0
      %1431 = vmatpush2.msra.mxu0 0.0
      %1432 = vmatprep.subr.mxu0 0.0
      %1433 = vmatpush2.msra.mxu0 0.0
      %1434 = vmatprep.subr.mxu0 0.0
      %1435 = vmatpush2.msra.mxu0 0.0
      %1436 = vmatprep.subr.mxu0 0.0
      %1437 = vmatpush2.msra.mxu0 0.0
      %1438 = vmatprep.subr.mxu0 0.0
      %1439 = vmatpush2.msra.mxu0 0.0
      %1440 = vmatprep.subr.mxu0 0.0
      %1441 = vmatpush2.msra.mxu0 0.0
      %1442 = vmatprep.subr.mxu0 0.0
      %1443 = vmatpush2.msra.mxu0 0.0
      %1444 = vmatprep.subr.mxu0 0.0
      %1445 = vmatpush2.msra.mxu0 0.0
      %1446 = vmatprep.subr.mxu0 0.0
      %1447 = vmatpush2.msra.mxu0 0.0
      %1448 = vmatprep.subr.mxu0 0.0
      %1449 = vmatpush2.msra.mxu0 0.0
      %1450 = vmatprep.subr.mxu0 0.0
      %1451 = vmatpush2.msra.mxu0 0.0
      %1452 = vmatprep.subr.mxu0 0.0
      %1453 = vmatpush2.msra.mxu0 0.0
      %1454 = vmatprep.subr.mxu0 0.0
      %1455 = vmatpush2.msra.mxu0 0.0
      %1456 = vmatprep.subr.mxu0 0.0
      %1457 = vmatpush2.msra.mxu0 0.0
      %1458 = vmatprep.subr.mxu0 0.0
      %1459 = vmatpush2.msra.mxu0 0.0
      %1460 = vmatprep.subr.mxu0 0.0
      %1461 = vmatpush2.msra.mxu0 0.0
      %1462 = vmatprep.mubr.f32.mxu0 0.0
      %1463 = vmatmul.mubr.f32.gmra.mxu0 %v1386
      %v1464 = vpop.f32.mrf.mxu0
      %v1465 = vadd.f32 %v1377, %v1464
      %v1466 = vpop.f32.mrf.mxu0
      %v1467 = vadd.f32 %v1377, %v1466
      %1468 = vmatprep.mubr.f32.mxu0 0.0
      %1469 = vmatmul.mubr.f32.gmra.mxu0 %v1389
      %v1470 = vpop.f32.mrf.mxu0
      %v1471 = vadd.f32 %v1382, %v1470
      %v1472 = vpop.f32.mrf.mxu0
      %v1473 = vadd.f32 %v1382, %v1472
      %1474 = vdwg.mxu0
      %v1475 = vmax.f32 %v1465, 0.0
      %v1476 = vmax.f32 %v1467, 0.0
      %v1477 = vmax.f32 %v1471, 0.0
      %v1478 = vmax.f32 %v1473, 0.0
      %1479 = vst [vmem:[#allocation6] sm:$0xff] 0.0
      %1480 = vst [vmem:[#allocation6 + $0x20] sm:$0xff] 0.0
      %1481 = vst [vmem:[#allocation6 + $0x18] sm:$0xff] 0.0
      %1482 = vst [vmem:[#allocation6 + $0x38] sm:$0xff] 0.0
      %1483 = vst [vmem:[#allocation6 + $0x8] sm:$0xff] %v1475
      %1484 = vst [vmem:[#allocation6 + $0x10] sm:$0xff] %v1476
      %1485 = vst [vmem:[#allocation6 + $0x28] sm:$0xff] %v1477
      %1486 = vst [vmem:[#allocation6 + $0x30] sm:$0xff] %v1478
      %v1487 = vld [vmem:[#allocation6] sm:$0xff]
      %v1488 = vld [vmem:[#allocation6 + $0x8] sm:$0xff]
      %v1489 = vld [vmem:[#allocation6 + $0x10] sm:$0xff]
      %v1490 = vld [vmem:[#allocation6 + $0x20] sm:$0xff]
      %v1491 = vld [vmem:[#allocation6 + $0x28] sm:$0xff]
      %v1492 = vld [vmem:[#allocation6 + $0x30] sm:$0xff]
      %1493 = vrot.lane.b32.xlu0 %v456, 111
      %v1494 = vpop.permute.xlu0 %1493
      %1495 = vrot.lane.b32.xlu0 %v460, 111
      %v1496 = vpop.permute.xlu0 %1495
      %v1497 = vsel %vm465, %v1494, %v1496
      %v1501 = vmul.f32 %v1487, %v1494
      %v1502 = vmul.f32 %v1488, %v1497
      %v1503 = vmul.f32 %v1489, %v1496
      %v1504 = vmul.f32 %v1490, %v1494
      %v1505 = vmul.f32 %v1491, %v1497
      %v1506 = vmul.f32 %v1492, %v1496
      %1513 = vrot.lane.b32.xlu0 %v1501, 17
      %v1514 = vpop.permute.xlu0 %1513
      %1515 = vrot.lane.b32.xlu0 %v1502, 17
      %v1516 = vpop.permute.xlu0 %1515
      %1517 = vrot.lane.b32.xlu0 %v1503, 17
      %v1518 = vpop.permute.xlu0 %1517
      %1519 = vrot.lane.b32.xlu0 %v1504, 17
      %v1520 = vpop.permute.xlu0 %1519
      %1521 = vrot.lane.b32.xlu0 %v1505, 17
      %v1522 = vpop.permute.xlu0 %1521
      %1523 = vrot.lane.b32.xlu0 %v1506, 17
      %v1524 = vpop.permute.xlu0 %1523
      %v1525 = vsel %vm480, %v1514, %v1516
      %v1526 = vsel %vm480, %v1516, %v1518
      %v1527 = vsel %vm480, %v1520, %v1522
      %v1528 = vsel %vm480, %v1522, %v1524
      %1533 = vst [vmem:[#allocation7] sm:$0xff] %v1525
      %1534 = vst [vmem:[#allocation7 + $0x8] sm:$0xff] %v1526
      %1535 = vst [vmem:[#allocation7 + $0x10] sm:$0xff] %v1527
      %1536 = vst [vmem:[#allocation7 + $0x18] sm:$0xff] %v1528
      %v1537 = vld [vmem:[#allocation6] sm:$0xff]
      %v1538 = vld [vmem:[#allocation6 + $0x8] sm:$0xff]
      %v1539 = vld [vmem:[#allocation6 + $0x10] sm:$0xff]
      %v1540 = vld [vmem:[#allocation6 + $0x20] sm:$0xff]
      %v1541 = vld [vmem:[#allocation6 + $0x28] sm:$0xff]
      %v1542 = vld [vmem:[#allocation6 + $0x30] sm:$0xff]
      %1549 = vrot.lane.b32.xlu0 %v1537, 16
      %v1550 = vpop.permute.xlu0 %1549
      %1551 = vrot.lane.b32.xlu0 %v1538, 16
      %v1552 = vpop.permute.xlu0 %1551
      %1553 = vrot.lane.b32.xlu0 %v1539, 16
      %v1554 = vpop.permute.xlu0 %1553
      %1555 = vrot.lane.b32.xlu0 %v1540, 16
      %v1556 = vpop.permute.xlu0 %1555
      %1557 = vrot.lane.b32.xlu0 %v1541, 16
      %v1558 = vpop.permute.xlu0 %1557
      %1559 = vrot.lane.b32.xlu0 %v1542, 16
      %v1560 = vpop.permute.xlu0 %1559
      %v1561 = vsel %vm499, %v1550, %v1552
      %v1562 = vsel %vm499, %v1552, %v1554
      %v1563 = vsel %vm499, %v1556, %v1558
      %v1564 = vsel %vm499, %v1558, %v1560
      %1569 = vst [vmem:[#allocation7 + $0x20] sm:$0xff] %v1561
      %1570 = vst [vmem:[#allocation7 + $0x28] sm:$0xff] %v1562
      %1571 = vst [vmem:[#allocation7 + $0x30] sm:$0xff] %v1563
      %1572 = vst [vmem:[#allocation7 + $0x38] sm:$0xff] %v1564
      %v1573 = vld [vmem:[#allocation6] sm:$0xff]
      %v1574 = vld [vmem:[#allocation6 + $0x8] sm:$0xff]
      %v1575 = vld [vmem:[#allocation6 + $0x10] sm:$0xff]
      %v1576 = vld [vmem:[#allocation6 + $0x20] sm:$0xff]
      %v1577 = vld [vmem:[#allocation6 + $0x28] sm:$0xff]
      %v1578 = vld [vmem:[#allocation6 + $0x30] sm:$0xff]
      %1579 = vrot.lane.b32.xlu0 %v512, 113
      %v1580 = vpop.permute.xlu0 %1579
      %1581 = vrot.lane.b32.xlu0 %v516, 113
      %v1582 = vpop.permute.xlu0 %1581
      %v1583 = vsel %vm521, %v1580, %v1582
      %v1587 = vmul.f32 %v1573, %v1580
      %v1588 = vmul.f32 %v1574, %v1583
      %v1589 = vmul.f32 %v1575, %v1582
      %v1590 = vmul.f32 %v1576, %v1580
      %v1591 = vmul.f32 %v1577, %v1583
      %v1592 = vmul.f32 %v1578, %v1582
      %1599 = vrot.lane.b32.xlu0 %v1587, 15
      %v1600 = vpop.permute.xlu0 %1599
      %1601 = vrot.lane.b32.xlu0 %v1588, 15
      %v1602 = vpop.permute.xlu0 %1601
      %1603 = vrot.lane.b32.xlu0 %v1589, 15
      %v1604 = vpop.permute.xlu0 %1603
      %1605 = vrot.lane.b32.xlu0 %v1590, 15
      %v1606 = vpop.permute.xlu0 %1605
      %1607 = vrot.lane.b32.xlu0 %v1591, 15
      %v1608 = vpop.permute.xlu0 %1607
      %1609 = vrot.lane.b32.xlu0 %v1592, 15
      %v1610 = vpop.permute.xlu0 %1609
      %v1611 = vsel %vm536, %v1600, %v1602
      %v1612 = vsel %vm536, %v1602, %v1604
      %v1613 = vsel %vm536, %v1606, %v1608
      %v1614 = vsel %vm536, %v1608, %v1610
      %1619 = vst [vmem:[#allocation7 + $0x40] sm:$0xff] %v1611
      %1620 = vst [vmem:[#allocation7 + $0x48] sm:$0xff] %v1612
      %1621 = vst [vmem:[#allocation7 + $0x50] sm:$0xff] %v1613
      %1622 = vst [vmem:[#allocation7 + $0x58] sm:$0xff] %v1614
      %v1623 = vld [vmem:[#allocation6] sm:$0xff]
      %v1624 = vld [vmem:[#allocation6 + $0x8] sm:$0xff]
      %v1625 = vld [vmem:[#allocation6 + $0x10] sm:$0xff]
      %v1626 = vld [vmem:[#allocation6 + $0x20] sm:$0xff]
      %v1627 = vld [vmem:[#allocation6 + $0x28] sm:$0xff]
      %v1628 = vld [vmem:[#allocation6 + $0x30] sm:$0xff]
      %1629 = vrot.lane.b32.xlu0 %v456, 127
      %v1630 = vpop.permute.xlu0 %1629
      %1631 = vrot.lane.b32.xlu0 %v460, 127
      %v1632 = vpop.permute.xlu0 %1631
      %v1633 = vsel %vm548, %v1630, %v1632
      %v1637 = vmul.f32 %v1623, %v1630
      %v1638 = vmul.f32 %v1624, %v1633
      %v1639 = vmul.f32 %v1625, %v1632
      %v1640 = vmul.f32 %v1626, %v1630
      %v1641 = vmul.f32 %v1627, %v1633
      %v1642 = vmul.f32 %v1628, %v1632
      %1649 = vrot.lane.b32.xlu0 %v1637, 1
      %v1650 = vpop.permute.xlu0 %1649
      %1651 = vrot.lane.b32.xlu0 %v1638, 1
      %v1652 = vpop.permute.xlu0 %1651
      %1653 = vrot.lane.b32.xlu0 %v1639, 1
      %v1654 = vpop.permute.xlu0 %1653
      %1655 = vrot.lane.b32.xlu0 %v1640, 1
      %v1656 = vpop.permute.xlu0 %1655
      %1657 = vrot.lane.b32.xlu0 %v1641, 1
      %v1658 = vpop.permute.xlu0 %1657
      %1659 = vrot.lane.b32.xlu0 %v1642, 1
      %v1660 = vpop.permute.xlu0 %1659
      %v1661 = vsel %vm564, %v1650, %v1652
      %v1662 = vsel %vm564, %v1652, %v1654
      %v1663 = vsel %vm564, %v1656, %v1658
      %v1664 = vsel %vm564, %v1658, %v1660
      %1669 = vst [vmem:[#allocation7 + $0x60] sm:$0xff] %v1661
      %1670 = vst [vmem:[#allocation7 + $0x68] sm:$0xff] %v1662
      %1671 = vst [vmem:[#allocation7 + $0x70] sm:$0xff] %v1663
      %1672 = vst [vmem:[#allocation7 + $0x78] sm:$0xff] %v1664
      %v1673 = vld [vmem:[#allocation6 + $0x8] sm:$0xff]
      %v1674 = vld [vmem:[#allocation6 + $0x10] sm:$0xff]
      %v1675 = vld [vmem:[#allocation6 + $0x28] sm:$0xff]
      %v1676 = vld [vmem:[#allocation6 + $0x30] sm:$0xff]
      %1677 = vst [vmem:[#allocation7 + $0x80] sm:$0xff] %v1673
      %1678 = vst [vmem:[#allocation7 + $0x88] sm:$0xff] %v1674
      %1679 = vst [vmem:[#allocation7 + $0x90] sm:$0xff] %v1675
      %1680 = vst [vmem:[#allocation7 + $0x98] sm:$0xff] %v1676
      %v1681 = vld [vmem:[#allocation6 + $0x8] sm:$0xff]
      %v1682 = vld [vmem:[#allocation6 + $0x10] sm:$0xff]
      %v1683 = vld [vmem:[#allocation6 + $0x18] sm:$0xff]
      %v1684 = vld [vmem:[#allocation6 + $0x28] sm:$0xff]
      %v1685 = vld [vmem:[#allocation6 + $0x30] sm:$0xff]
      %v1686 = vld [vmem:[#allocation6 + $0x38] sm:$0xff]
      %1687 = vrot.lane.b32.xlu0 %v512, 1
      %v1688 = vpop.permute.xlu0 %1687
      %1689 = vrot.lane.b32.xlu0 %v516, 1
      %v1690 = vpop.permute.xlu0 %1689
      %v1691 = vsel %vm564, %v1688, %v1690
      %v1695 = vmul.f32 %v1681, %v1688
      %v1696 = vmul.f32 %v1682, %v1691
      %v1697 = vmul.f32 %v1683, %v1690
      %v1698 = vmul.f32 %v1684, %v1688
      %v1699 = vmul.f32 %v1685, %v1691
      %v1700 = vmul.f32 %v1686, %v1690
      %1707 = vrot.lane.b32.xlu0 %v1695, 127
      %v1708 = vpop.permute.xlu0 %1707
      %1709 = vrot.lane.b32.xlu0 %v1696, 127
      %v1710 = vpop.permute.xlu0 %1709
      %1711 = vrot.lane.b32.xlu0 %v1697, 127
      %v1712 = vpop.permute.xlu0 %1711
      %1713 = vrot.lane.b32.xlu0 %v1698, 127
      %v1714 = vpop.permute.xlu0 %1713
      %1715 = vrot.lane.b32.xlu0 %v1699, 127
      %v1716 = vpop.permute.xlu0 %1715
      %1717 = vrot.lane.b32.xlu0 %v1700, 127
      %v1718 = vpop.permute.xlu0 %1717
      %v1719 = vsel %vm548, %v1708, %v1710
      %v1720 = vsel %vm548, %v1710, %v1712
      %v1721 = vsel %vm548, %v1714, %v1716
      %v1722 = vsel %vm548, %v1716, %v1718
      %1727 = vst [vmem:[#allocation7 + $0xa0] sm:$0xff] %v1719
      %1728 = vst [vmem:[#allocation7 + $0xa8] sm:$0xff] %v1720
      %1729 = vst [vmem:[#allocation7 + $0xb0] sm:$0xff] %v1721
      %1730 = vst [vmem:[#allocation7 + $0xb8] sm:$0xff] %v1722
      %v1731 = vld [vmem:[#allocation6 + $0x8] sm:$0xff]
      %v1732 = vld [vmem:[#allocation6 + $0x10] sm:$0xff]
      %v1733 = vld [vmem:[#allocation6 + $0x18] sm:$0xff]
      %v1734 = vld [vmem:[#allocation6 + $0x28] sm:$0xff]
      %v1735 = vld [vmem:[#allocation6 + $0x30] sm:$0xff]
      %v1736 = vld [vmem:[#allocation6 + $0x38] sm:$0xff]
      %1737 = vrot.lane.b32.xlu0 %v456, 15
      %v1738 = vpop.permute.xlu0 %1737
      %1739 = vrot.lane.b32.xlu0 %v460, 15
      %v1740 = vpop.permute.xlu0 %1739
      %v1741 = vsel %vm536, %v1738, %v1740
      %v1745 = vmul.f32 %v1731, %v1738
      %v1746 = vmul.f32 %v1732, %v1741
      %v1747 = vmul.f32 %v1733, %v1740
      %v1748 = vmul.f32 %v1734, %v1738
      %v1749 = vmul.f32 %v1735, %v1741
      %v1750 = vmul.f32 %v1736, %v1740
      %1757 = vrot.lane.b32.xlu0 %v1745, 113
      %v1758 = vpop.permute.xlu0 %1757
      %1759 = vrot.lane.b32.xlu0 %v1746, 113
      %v1760 = vpop.permute.xlu0 %1759
      %1761 = vrot.lane.b32.xlu0 %v1747, 113
      %v1762 = vpop.permute.xlu0 %1761
      %1763 = vrot.lane.b32.xlu0 %v1748, 113
      %v1764 = vpop.permute.xlu0 %1763
      %1765 = vrot.lane.b32.xlu0 %v1749, 113
      %v1766 = vpop.permute.xlu0 %1765
      %1767 = vrot.lane.b32.xlu0 %v1750, 113
      %v1768 = vpop.permute.xlu0 %1767
      %v1769 = vsel %vm521, %v1758, %v1760
      %v1770 = vsel %vm521, %v1760, %v1762
      %v1771 = vsel %vm521, %v1764, %v1766
      %v1772 = vsel %vm521, %v1766, %v1768
      %1777 = vst [vmem:[#allocation7 + $0xc0] sm:$0xff] %v1769
      %1778 = vst [vmem:[#allocation7 + $0xc8] sm:$0xff] %v1770
      %1779 = vst [vmem:[#allocation7 + $0xd0] sm:$0xff] %v1771
      %1780 = vst [vmem:[#allocation7 + $0xd8] sm:$0xff] %v1772
      %v1781 = vld [vmem:[#allocation6 + $0x8] sm:$0xff]
      %v1782 = vld [vmem:[#allocation6 + $0x10] sm:$0xff]
      %v1783 = vld [vmem:[#allocation6 + $0x18] sm:$0xff]
      %v1784 = vld [vmem:[#allocation6 + $0x28] sm:$0xff]
      %v1785 = vld [vmem:[#allocation6 + $0x30] sm:$0xff]
      %v1786 = vld [vmem:[#allocation6 + $0x38] sm:$0xff]
      %1793 = vrot.lane.b32.xlu0 %v1781, 112
      %v1794 = vpop.permute.xlu0 %1793
      %1795 = vrot.lane.b32.xlu0 %v1782, 112
      %v1796 = vpop.permute.xlu0 %1795
      %1797 = vrot.lane.b32.xlu0 %v1783, 112
      %v1798 = vpop.permute.xlu0 %1797
      %1799 = vrot.lane.b32.xlu0 %v1784, 112
      %v1800 = vpop.permute.xlu0 %1799
      %1801 = vrot.lane.b32.xlu0 %v1785, 112
      %v1802 = vpop.permute.xlu0 %1801
      %1803 = vrot.lane.b32.xlu0 %v1786, 112
      %v1804 = vpop.permute.xlu0 %1803
      %v1805 = vsel %vm640, %v1794, %v1796
      %v1806 = vsel %vm640, %v1796, %v1798
      %v1807 = vsel %vm640, %v1800, %v1802
      %v1808 = vsel %vm640, %v1802, %v1804
      %1813 = vst [vmem:[#allocation7 + $0xe0] sm:$0xff] %v1805
      %1814 = vst [vmem:[#allocation7 + $0xe8] sm:$0xff] %v1806
      %1815 = vst [vmem:[#allocation7 + $0xf0] sm:$0xff] %v1807
      %1816 = vst [vmem:[#allocation7 + $0xf8] sm:$0xff] %v1808
      %v1817 = vld [vmem:[#allocation6 + $0x8] sm:$0xff]
      %v1818 = vld [vmem:[#allocation6 + $0x10] sm:$0xff]
      %v1819 = vld [vmem:[#allocation6 + $0x18] sm:$0xff]
      %v1820 = vld [vmem:[#allocation6 + $0x28] sm:$0xff]
      %v1821 = vld [vmem:[#allocation6 + $0x30] sm:$0xff]
      %v1822 = vld [vmem:[#allocation6 + $0x38] sm:$0xff]
      %1823 = vrot.lane.b32.xlu0 %v512, 17
      %v1824 = vpop.permute.xlu0 %1823
      %1825 = vrot.lane.b32.xlu0 %v516, 17
      %v1826 = vpop.permute.xlu0 %1825
      %v1827 = vsel %vm480, %v1824, %v1826
      %v1831 = vmul.f32 %v1817, %v1824
      %v1832 = vmul.f32 %v1818, %v1827
      %v1833 = vmul.f32 %v1819, %v1826
      %v1834 = vmul.f32 %v1820, %v1824
      %v1835 = vmul.f32 %v1821, %v1827
      %v1836 = vmul.f32 %v1822, %v1826
      %1843 = vrot.lane.b32.xlu0 %v1831, 111
      %v1844 = vpop.permute.xlu0 %1843
      %1845 = vrot.lane.b32.xlu0 %v1832, 111
      %v1846 = vpop.permute.xlu0 %1845
      %1847 = vrot.lane.b32.xlu0 %v1833, 111
      %v1848 = vpop.permute.xlu0 %1847
      %1849 = vrot.lane.b32.xlu0 %v1834, 111
      %v1850 = vpop.permute.xlu0 %1849
      %1851 = vrot.lane.b32.xlu0 %v1835, 111
      %v1852 = vpop.permute.xlu0 %1851
      %1853 = vrot.lane.b32.xlu0 %v1836, 111
      %v1854 = vpop.permute.xlu0 %1853
      %v1855 = vsel %vm465, %v1844, %v1846
      %v1856 = vsel %vm465, %v1846, %v1848
      %v1857 = vsel %vm465, %v1850, %v1852
      %v1858 = vsel %vm465, %v1852, %v1854
      %1863 = vst [vmem:[#allocation7 + $0x100] sm:$0xff] %v1855
      %1864 = vst [vmem:[#allocation7 + $0x108] sm:$0xff] %v1856
      %1865 = vst [vmem:[#allocation7 + $0x110] sm:$0xff] %v1857
      %1866 = vst [vmem:[#allocation7 + $0x118] sm:$0xff] %v1858
      %v1867 = vld [vmem:[%s11] sm:$0x3]
      %v1868 = vld [vmem:[#allocation7] sm:$0xff]
      %v1869 = vld [vmem:[#allocation7 + $0x8] sm:$0xff]
      %v1870 = vld [vmem:[#allocation7 + $0x10] sm:$0xff]
      %v1871 = vld [vmem:[#allocation7 + $0x18] sm:$0xff]
      %v1872 = vld [vmem:[#allocation7 + $0x20] sm:$0xff]
      %v1873 = vld [vmem:[#allocation7 + $0x28] sm:$0xff]
      %v1874 = vld [vmem:[#allocation7 + $0x30] sm:$0xff]
      %v1875 = vld [vmem:[#allocation7 + $0x38] sm:$0xff]
      %v1876 = vld [vmem:[#allocation7 + $0x40] sm:$0xff]
      %v1877 = vld [vmem:[#allocation7 + $0x48] sm:$0xff]
      %v1878 = vld [vmem:[#allocation7 + $0x50] sm:$0xff]
      %v1879 = vld [vmem:[#allocation7 + $0x58] sm:$0xff]
      %v1880 = vld [vmem:[#allocation7 + $0x60] sm:$0xff]
      %v1881 = vld [vmem:[#allocation7 + $0x68] sm:$0xff]
      %v1882 = vld [vmem:[#allocation7 + $0x70] sm:$0xff]
      %v1883 = vld [vmem:[#allocation7 + $0x78] sm:$0xff]
      %v1884 = vld [vmem:[#allocation7 + $0x80] sm:$0xff]
      %v1885 = vld [vmem:[#allocation7 + $0x88] sm:$0xff]
      %v1886 = vld [vmem:[#allocation7 + $0x90] sm:$0xff]
      %v1887 = vld [vmem:[#allocation7 + $0x98] sm:$0xff]
      %v1888 = vld [vmem:[#allocation7 + $0xa0] sm:$0xff]
      %v1889 = vld [vmem:[#allocation7 + $0xa8] sm:$0xff]
      %v1890 = vld [vmem:[#allocation7 + $0xb0] sm:$0xff]
      %v1891 = vld [vmem:[#allocation7 + $0xb8] sm:$0xff]
      %v1892 = vld [vmem:[#allocation7 + $0xc0] sm:$0xff]
      %v1893 = vld [vmem:[#allocation7 + $0xc8] sm:$0xff]
      %v1894 = vld [vmem:[#allocation7 + $0xd0] sm:$0xff]
      %v1895 = vld [vmem:[#allocation7 + $0xd8] sm:$0xff]
      %v1896 = vld [vmem:[#allocation7 + $0xe0] sm:$0xff]
      %v1897 = vld [vmem:[#allocation7 + $0xe8] sm:$0xff]
      %v1898 = vld [vmem:[#allocation7 + $0xf0] sm:$0xff]
      %v1899 = vld [vmem:[#allocation7 + $0xf8] sm:$0xff]
      %v1900 = vld [vmem:[#allocation7 + $0x100] sm:$0xff]
      %v1901 = vld [vmem:[#allocation7 + $0x108] sm:$0xff]
      %v1902 = vld [vmem:[#allocation7 + $0x110] sm:$0xff]
      %v1903 = vld [vmem:[#allocation7 + $0x118] sm:$0xff]
      %v1904 = vld [vmem:[#allocation8] sm:$0x1]
      %1906 = vset.pattern.permute.xlu0 0
      %1907 = vperm.xlu0 %1906, %v1904
      %v1908 = vpop.permute.xlu0 %1907
      %v1910 = vlaneseq
      %v1911 = vshrl.u32 %v1910, 7
      %v1912 = vsub.s32 0, %v1911
      %v1913 = vrot.slane %v1908, %v1912
      %v1915 = vlaneseq
      %v1916 = vshrl.u32 %v1915, 7
      %v1917 = vsub.s32 0, %v1916
      %v1918 = vrot.slane %v1867, %v1917
      %v1919 = vlaneseq
      %v1920 = vshrl.u32 %v1919, 7
      %v1921 = vsub.s32 1, %v1920
      %v1922 = vrot.slane %v1867, %v1921
      %v1924 = vsel %vm499, %v1922, 0
      %1926 = vmatprep.subr.mxu0 %v1899
      %1927 = vmatpush1.msra.mxu0 %v1898
      %1928 = vmatprep.subr.mxu0 %v1897
      %1929 = vmatpush1.msra.mxu0 %v1896
      %1930 = vmatprep.subr.mxu0 %v1895
      %1931 = vmatpush1.msra.mxu0 %v1894
      %1932 = vmatprep.subr.mxu0 %v1893
      %1933 = vmatpush1.msra.mxu0 %v1892
      %1934 = vmatprep.subr.mxu0 %v1891
      %1935 = vmatpush1.msra.mxu0 %v1890
      %1936 = vmatprep.subr.mxu0 %v1889
      %1937 = vmatpush1.msra.mxu0 %v1888
      %1938 = vmatprep.subr.mxu0 %v1887
      %1939 = vmatpush1.msra.mxu0 %v1886
      %1940 = vmatprep.subr.mxu0 %v1885
      %1941 = vmatpush1.msra.mxu0 %v1884
      %1942 = vmatprep.subr.mxu0 %v1883
      %1943 = vmatpush1.msra.mxu0 %v1882
      %1944 = vmatprep.subr.mxu0 %v1881
      %1945 = vmatpush1.msra.mxu0 %v1880
      %1946 = vmatprep.subr.mxu0 %v1879
      %1947 = vmatpush1.msra.mxu0 %v1878
      %1948 = vmatprep.subr.mxu0 %v1877
      %1949 = vmatpush1.msra.mxu0 %v1876
      %1950 = vmatprep.subr.mxu0 %v1875
      %1951 = vmatpush1.msra.mxu0 %v1874
      %1952 = vmatprep.subr.mxu0 %v1873
      %1953 = vmatpush1.msra.mxu0 %v1872
      %1954 = vmatprep.subr.mxu0 %v1871
      %1955 = vmatpush1.msra.mxu0 %v1870
      %1956 = vmatprep.subr.mxu0 %v1869
      %1957 = vmatpush1.msra.mxu0 %v1868
      %1958 = vmatprep.subr.mxu0 0.0
      %1959 = vmatpush2.msra.mxu0 0.0
      %1960 = vmatprep.subr.mxu0 0.0
      %1961 = vmatpush2.msra.mxu0 0.0
      %1962 = vmatprep.subr.mxu0 0.0
      %1963 = vmatpush2.msra.mxu0 0.0
      %1964 = vmatprep.subr.mxu0 0.0
      %1965 = vmatpush2.msra.mxu0 0.0
      %1966 = vmatprep.subr.mxu0 0.0
      %1967 = vmatpush2.msra.mxu0 0.0
      %1968 = vmatprep.subr.mxu0 0.0
      %1969 = vmatpush2.msra.mxu0 0.0
      %1970 = vmatprep.subr.mxu0 0.0
      %1971 = vmatpush2.msra.mxu0 0.0
      %1972 = vmatprep.subr.mxu0 0.0
      %1973 = vmatpush2.msra.mxu0 0.0
      %1974 = vmatprep.subr.mxu0 0.0
      %1975 = vmatpush2.msra.mxu0 0.0
      %1976 = vmatprep.subr.mxu0 0.0
      %1977 = vmatpush2.msra.mxu0 0.0
      %1978 = vmatprep.subr.mxu0 0.0
      %1979 = vmatpush2.msra.mxu0 0.0
      %1980 = vmatprep.subr.mxu0 0.0
      %1981 = vmatpush2.msra.mxu0 0.0
      %1982 = vmatprep.subr.mxu0 0.0
      %1983 = vmatpush2.msra.mxu0 0.0
      %1984 = vmatprep.subr.mxu0 0.0
      %1985 = vmatpush2.msra.mxu0 0.0
      %1986 = vmatprep.subr.mxu0 %v1903
      %1987 = vmatpush2.msra.mxu0 %v1902
      %1988 = vmatprep.subr.mxu0 %v1901
      %1989 = vmatpush2.msra.mxu0 %v1900
      %1990 = vmatprep.mubr.f32.mxu0 %v1924
      %1991 = vmatmul.mubr.f32.gmra.mxu0 %v1918
      %v1992 = vpop.f32.mrf.mxu0
      %v1993 = vadd.f32 %v1913, %v1992
      %v1994 = vpop.f32.mrf.mxu0
      %v1995 = vadd.f32 %v1913, %v1994
      %1996 = vdwg.mxu0
      %v1997 = vsub.f32 0.0, %v1993
      %v1998 = vsub.f32 0.0, %v1995
      %v1999 = vmul.f32 %v1997, 1.442695
      %v2000 = vpow.pop %v1999
      %v2001 = vmul.f32 %v1998, 1.442695
      %v2002 = vpow.pop %v2001
      %v2003 = vadd.f32 %v2000, 1.0
      %v2004 = vadd.f32 %v2002, 1.0
      %v2005 = vrcp.pop %v2003
      %v2006 = vmul.f32 1.0, %v2005
      %v2007 = vrcp.pop %v2004
      %v2008 = vmul.f32 1.0, %v2007
      %v2009 = vlaneseq
      %v2010 = vshrl.u32 %v2009, 7
      %v2011 = vsub.s32 0, %v2010
      %v2012 = vrot.slane %v2006, %v2011
      %v2013 = vlaneseq
      %v2014 = vshrl.u32 %v2013, 7
      %v2015 = vsub.s32 0, %v2014
      %v2016 = vrot.slane %v2008, %v2015
      %v2017 = vmul.f32 %v977, %v2012
      %v2018 = vmul.f32 %v978, %v2016
      %v2021 = vcombine.low %v2017, %v2018
      %2023 = vst [vmem:[%s442] sm:$0xff] %v2021
      %p2024 = scmp.lt.s32.totalorder %s26, 1
      %s2025 = scalar_select %p2024, %s26, 1
      %s2026 = smul.addr %s2025, 2
      %s2027 = smul.addr %s2026, 4
      %s2028 = scalar_lea.vmem %s13, %s2027
      // Predicated region
      $region73: #{cbam_forward.1} parent=71 // pred_check
        %p2029 = pneg %p322
      $region74: #{cbam_forward.1} parent=71 // pred_check_branch
        %2031 = sbr.rel (%p2029) target = $region76
      $region75: #{cbam_forward.1} parent=71 // pred_region
        _
      $region76: #{cbam_forward.1} parent=71 // pred_fallthru
        _
    $region72: #{cbam_forward.1} parent=5 // pred_fallthru
      _
    %p2032 = scmp.le.s32.totalorder 2, %s21
    // Predicated region
    $region77: #{cbam_forward.1} parent=5 // pred_check
      %p2033 = pneg %p2032
    $region78: #{cbam_forward.1} parent=5 // pred_check_branch
      %2035 = sbr.rel (%p2033) target = $region80
    $region79: #{cbam_forward.1} parent=5 // pred_region
      %s2036 = ssub.s32 %s21, 2
      // Predicated region
      $region81: #{cbam_forward.1} parent=79 // pred_check
        %p2037 = pneg %p328
      $region82: #{cbam_forward.1} parent=79 // pred_check_branch
        %2039 = sbr.rel (%p2037) target = $region84
      $region83: #{cbam_forward.1} parent=79 // pred_region
        %p2040 = scmp.lt.s32.totalorder %s27, 1
        %s2041 = scalar_select %p2040, %s27, 1
        %s2042 = smul.addr %s2041, 2
        %s2043 = smul.addr %s2042, 4
        %s2044 = scalar_lea.vmem %s13, %s2043
      $region84: #{cbam_forward.1} parent=79 // pred_fallthru
        _
    $region80: #{cbam_forward.1} parent=5 // pred_fallthru
      _
  $region6: #{cbam_forward.1} parent=0 // loop_footer
    %s25 = sadd.s32 1, %s21
  $region7: #{cbam_forward.1} parent=0 // loop_footer_branch
    %20 = sbr.rel target = $region3
  $region8: #{cbam_forward.1} parent=0 // loop_exit
    _

</llo_original>
